<compile_context>
chip_gen: v7x
topology: tpu7x:2x2x1
jax: 0.10.0
libtpu: 0.0.40
codegen_flags: <defaults>
</compile_context>

<pallas_src>
import jax
import jax.numpy as jnp
from jax.experimental import pallas as pl
from jax.experimental.pallas import tpu as pltpu

N_EMBD = 32
N_HEAD = 6
HEAD_SIZE = N_EMBD // N_HEAD          # 5
HEAD_PAD = 8                          # head dim padded to a sublane-aligned 8
FF_HIDDEN = 4 * N_EMBD                # 128
BLOCK_SIZE = 256
EPS = 1e-5

Q_OFF = 0
K_OFF = N_HEAD * HEAD_PAD             # 48
V_OFF = 2 * N_HEAD * HEAD_PAD         # 96
QKV_W = V_OFF + N_HEAD * N_EMBD       # 288 fused lanes


def _layernorm(x, g, b):
    mu = jnp.mean(x, axis=-1, keepdims=True)
    var = jnp.mean((x - mu) ** 2, axis=-1, keepdims=True)
    return (x - mu) * jax.lax.rsqrt(var + EPS) * g + b


def _block_kernel(x_ref,
                  ln1_g_ref, ln1_b_ref,
                  wqkv_ref, bp_ref,
                  ln2_g_ref, ln2_b_ref,
                  w1_ref, b1_ref, w2_ref, b2_ref,
                  o_ref):
    Bb, T, C = x_ref.shape
    M = Bb * T
    Dp = HEAD_PAD

    # Flatten (Bb, T) -> M rows for all dense layers (cheap: leading dims only).
    x = x_ref[...].reshape(M, C).astype(jnp.float32)

    # ---- self-attention branch ----
    xln = _layernorm(x, ln1_g_ref[...], ln1_b_ref[...])                # (M, C)

    # One fused QKV' matmul: (M,32)@(32,288), bf16 operands, f32 accumulation.
    #   lanes [0,48)   : per-head Q (8-wide, scale folded in, zero-padded)
    #   lanes [48,96)  : per-head K (8-wide, zero-padded)
    #   lanes [96,288) : per-head V' = Wv_h @ Wp_h (32-wide, projection folded)
    qkv = jnp.dot(xln.astype(jnp.bfloat16), wqkv_ref[...],
                  preferred_element_type=jnp.float32).astype(jnp.bfloat16)

    # Additive causal mask, hoisted out of the head loop.
    row = jax.lax.broadcasted_iota(jnp.int32, (T, T), 0)
    col = jax.lax.broadcasted_iota(jnp.int32, (T, T), 1)
    mask_add = jnp.where(row >= col, 0.0, -1e30).astype(jnp.float32)

    sa = jnp.zeros((Bb, T, C), jnp.float32)
    # Static 6-way unroll; per-head (Bb,T,T) buffers stay small because
    # batch_block is VMEM-capped in the wrapper.
    for h in range(N_HEAD):
        q_h = qkv[:, Q_OFF + h * Dp: Q_OFF + (h + 1) * Dp].reshape(Bb, T, Dp)
        k_h = qkv[:, K_OFF + h * Dp: K_OFF + (h + 1) * Dp].reshape(Bb, T, Dp)
        v_h = qkv[:, V_OFF + h * C: V_OFF + (h + 1) * C].reshape(Bb, T, C)

        # Scores: contract the head dim of q and k directly (no explicit k.T).
        s = jax.lax.dot_general(q_h, k_h,
                                (((2,), (2,)), ((0,), (0,))),
                                preferred_element_type=jnp.float32)    # (Bb,T,T)
        s = s + mask_add

        # Unnormalized softmax; normalization deferred past the PV matmul.
        m = jnp.max(s, axis=-1, keepdims=True)
        e = jnp.exp(s - m)
        denom = jnp.sum(e, axis=-1, keepdims=True)

        out_h = jax.lax.dot_general(e.astype(jnp.bfloat16), v_h,
                                    (((2,), (1,)), ((0,), (0,))),
                                    preferred_element_type=jnp.float32)  # (Bb,T,C)
        # Normalize the small (Bb,T,32) result; reciprocal goes to the EUP slot.
        sa = sa + out_h * pl.reciprocal(denom, approx=True)
        # dropout(p=0.2) on attention weights / projection: identity in eval mode

    x1 = x + sa.reshape(M, C) + bp_ref[...]                # residual 1 (+ proj bias)

    # ---- feed-forward branch ----
    xln2 = _layernorm(x1, ln2_g_ref[...], ln2_b_ref[...])
    hid = jnp.dot(xln2.astype(jnp.bfloat16), w1_ref[...],
                  preferred_element_type=jnp.float32) + b1_ref[...]
    hid = jnp.maximum(hid, 0.0)                            # ReLU
    ff = jnp.dot(hid.astype(jnp.bfloat16), w2_ref[...],
                 preferred_element_type=jnp.float32) + b2_ref[...]

    # Single full-block store.
    o_ref[...] = (x1 + ff).reshape(Bb, T, C).astype(o_ref.dtype)


def _build_fused_weights(p):
    """Fused, lane-aligned QKV' weight with scale folded into Q and the 30->32
    output projection folded per-head into V.  Returned in bf16 (MXU operand)."""
    scale = jnp.float32(N_EMBD) ** -0.5
    pad = HEAD_PAD - HEAD_SIZE

    def pack(w):                                   # (H, C, D) -> (C, H*D)
        return jnp.transpose(w, (1, 0, 2)).reshape(N_EMBD, -1)

    wq = pack(jnp.pad(p["wq"] * scale, ((0, 0), (0, 0), (0, pad))))    # (32, 48)
    wk = pack(jnp.pad(p["wk"], ((0, 0), (0, 0), (0, pad))))            # (32, 48)
    wp_h = p["wp"].reshape(N_HEAD, HEAD_SIZE, N_EMBD)                  # (H, 5, 32)
    wv_fused = pack(jnp.einsum("hcd,hde->hce", p["wv"], wp_h))         # (32, 192)
    wqkv = jnp.concatenate([wq, wk, wv_fused], axis=-1)                # (32, 288)
    assert wqkv.shape == (N_EMBD, QKV_W)
    return wqkv.astype(jnp.bfloat16)


def _pick_batch_block(B, T):
    """Largest divisor of B that keeps the per-head score intermediates small
    (~3 live (bb,T,T) f32 tensors <= ~8 MiB) and, when possible, gives an even
    grid with >= 4 steps (v7x megacore + pipelining)."""
    score_bytes = 3 * T * T * 4
    cap = max(1, min(16, (8 << 20) // max(1, score_bytes)))
    divisors = [d for d in range(1, B + 1) if B % d == 0]
    for pred in (
        lambda d: d <= cap and (B // d) >= 4 and (B // d) % 2 == 0,
        lambda d: d <= cap and (B // d) >= 2 and (B // d) % 2 == 0,
        lambda d: d <= cap and (B // d) >= 2,
        lambda d: d <= cap,
    ):
        cands = [d for d in divisors if pred(d)]
        if cands:
            return max(cands)
    return B


def block_forward(x, params, *, batch_block=None):
    """x: (B, T, C) float32.  params: dict of weights (see init_params)."""
    B, T, C = x.shape
    assert C == N_EMBD and T <= BLOCK_SIZE

    wqkv = _build_fused_weights(params)

    if batch_block is None:
        batch_block = _pick_batch_block(B, T)
    assert B % batch_block == 0
    grid = (B // batch_block,)

    param_list = [
        params["ln1_g"], params["ln1_b"],
        wqkv, params["bp"],
        params["ln2_g"], params["ln2_b"],
        params["w1"].astype(jnp.bfloat16), params["b1"],
        params["w2"].astype(jnp.bfloat16), params["b2"],
    ]

    def full_spec(arr):
        nd = arr.ndim
        return pl.BlockSpec(arr.shape, lambda i, nd=nd: (0,) * nd)

    grid_spec = pltpu.PrefetchScalarGridSpec(
        num_scalar_prefetch=0,
        grid=grid,
        in_specs=[pl.BlockSpec((batch_block, T, C), lambda i: (i, 0, 0))]
                 + [full_spec(p) for p in param_list],
        out_specs=pl.BlockSpec((batch_block, T, C), lambda i: (i, 0, 0)),
    )

    return pl.pallas_call(
        _block_kernel,
        out_shape=jax.ShapeDtypeStruct((B, T, C), x.dtype),
        grid_spec=grid_spec,
        compiler_params=pltpu.CompilerParams(
            dimension_semantics=("parallel",),
            vmem_limit_bytes=32 * 1024 * 1024),
    )(x, *param_list)


def init_params(key):
    ks = jax.random.split(key, 12)
    p = {}
    p["ln1_g"] = (1.0 + 0.1 * jax.random.normal(ks[0], (1, N_EMBD))).astype(jnp.float32)
    p["ln1_b"] = (0.1 * jax.random.normal(ks[1], (1, N_EMBD))).astype(jnp.float32)
    p["ln2_g"] = (1.0 + 0.1 * jax.random.normal(ks[2], (1, N_EMBD))).astype(jnp.float32)
    p["ln2_b"] = (0.1 * jax.random.normal(ks[3], (1, N_EMBD))).astype(jnp.float32)
    # per-head attention projections, no bias: (H, C, D)
    p["wq"] = (0.1 * jax.random.normal(ks[4], (N_HEAD, N_EMBD, HEAD_SIZE))).astype(jnp.float32)
    p["wk"] = (0.1 * jax.random.normal(ks[5], (N_HEAD, N_EMBD, HEAD_SIZE))).astype(jnp.float32)
    p["wv"] = (0.1 * jax.random.normal(ks[6], (N_HEAD, N_EMBD, HEAD_SIZE))).astype(jnp.float32)
    # output projection (concat dim 30 -> n_embd 32)
    p["wp"] = (0.1 * jax.random.normal(ks[7], (N_HEAD * HEAD_SIZE, N_EMBD))).astype(jnp.float32)
    p["bp"] = (0.1 * jax.random.normal(ks[8], (1, N_EMBD))).astype(jnp.float32)
    # feed-forward
    p["w1"] = (0.1 * jax.random.normal(ks[9], (N_EMBD, FF_HIDDEN))).astype(jnp.float32)
    p["b1"] = (0.1 * jax.random.normal(ks[10], (1, FF_HIDDEN))).astype(jnp.float32)
    p["w2"] = (0.1 * jax.random.normal(ks[11], (FF_HIDDEN, N_EMBD))).astype(jnp.float32)
    p["b2"] = jnp.zeros((1, N_EMBD), jnp.float32)
    return p


def block_reference(x, p):
    """Pure-JAX f32 reference mirroring the PyTorch forward (eval mode)."""
    B, T, C = x.shape
    scale = jnp.float32(N_EMBD) ** -0.5
    causal = jnp.tril(jnp.ones((T, T), jnp.bool_))

    xln = _layernorm(x, p["ln1_g"][0], p["ln1_b"][0])
    outs = []
    for h in range(N_HEAD):
        q = xln @ p["wq"][h]
        k = xln @ p["wk"][h]
        v = xln @ p["wv"][h]
        wei = jnp.einsum("btd,bsd->bts", q, k) * scale
        wei = jnp.where(causal, wei, -jnp.inf)
        wei = jax.nn.softmax(wei, axis=-1)
        outs.append(jnp.einsum("bts,bsd->btd", wei, v))
    cat = jnp.concatenate(outs, axis=-1)
    x1 = x + cat @ p["wp"] + p["bp"][0]

    xln2 = _layernorm(x1, p["ln2_g"][0], p["ln2_b"][0])
    hid = jnp.maximum(xln2 @ p["w1"] + p["b1"][0], 0.0)
    return x1 + hid @ p["w2"] + p["b2"][0]


if __name__ == "__main__":
    B, T = 2, 8        # T <= block_size (256)
    key = jax.random.PRNGKey(0)
    kx, kp = jax.random.split(key)
    x = jax.random.normal(kx, (B, T, N_EMBD), jnp.float32)
    params = init_params(kp)

    out = block_forward(x, params)
    out = jax.block_until_ready(out)

    ref = block_reference(x, params)
    assert out.shape == (B, T, N_EMBD)
    assert bool(jnp.all(jnp.isfinite(out)))
    # bf16 MXU operands + approx reciprocal: validate within a slightly looser tolerance.
    assert bool(jnp.allclose(out, ref, atol=2e-2, rtol=2e-2)), "mismatch vs reference"

    print("KERNEL_OK")
</pallas_src>

<mosaic_0001>
module attributes {stable_mosaic.version = 11 : i64} {
  func.func @_block_kernel(%arg0: i32, %arg1: memref<1x8x32xf32, #tpu.memory_space<vmem>>, %arg2: memref<1x32xf32, #tpu.memory_space<vmem>>, %arg3: memref<1x32xf32, #tpu.memory_space<vmem>>, %arg4: memref<32x288xbf16, #tpu.memory_space<vmem>>, %arg5: memref<1x32xf32, #tpu.memory_space<vmem>>, %arg6: memref<1x32xf32, #tpu.memory_space<vmem>>, %arg7: memref<1x32xf32, #tpu.memory_space<vmem>>, %arg8: memref<32x128xbf16, #tpu.memory_space<vmem>>, %arg9: memref<1x128xf32, #tpu.memory_space<vmem>>, %arg10: memref<128x32xbf16, #tpu.memory_space<vmem>>, %arg11: memref<1x32xf32, #tpu.memory_space<vmem>>, %arg12: memref<1x8x32xf32, #tpu.memory_space<vmem>>) attributes {dimension_semantics = [#tpu.dimension_semantics<parallel>], iteration_bounds = array<i64: 2>, scalar_prefetch = 0 : i64, scratch_operands = 0 : i64, tpu.core_type = #tpu.core_type<tc>, window_params = [{transform_indices = @transform_0, window_bounds = array<i64: 1, 8, 32>}, {pipeline_mode = #tpu.pipeline_mode<synchronous>, transform_indices = @transform_1, window_bounds = array<i64: 1, 32>}, {pipeline_mode = #tpu.pipeline_mode<synchronous>, transform_indices = @transform_2, window_bounds = array<i64: 1, 32>}, {pipeline_mode = #tpu.pipeline_mode<synchronous>, transform_indices = @transform_3, window_bounds = array<i64: 32, 288>}, {pipeline_mode = #tpu.pipeline_mode<synchronous>, transform_indices = @transform_4, window_bounds = array<i64: 1, 32>}, {pipeline_mode = #tpu.pipeline_mode<synchronous>, transform_indices = @transform_5, window_bounds = array<i64: 1, 32>}, {pipeline_mode = #tpu.pipeline_mode<synchronous>, transform_indices = @transform_6, window_bounds = array<i64: 1, 32>}, {pipeline_mode = #tpu.pipeline_mode<synchronous>, transform_indices = @transform_7, window_bounds = array<i64: 32, 128>}, {pipeline_mode = #tpu.pipeline_mode<synchronous>, transform_indices = @transform_8, window_bounds = array<i64: 1, 128>}, {pipeline_mode = #tpu.pipeline_mode<synchronous>, transform_indices = @transform_9, window_bounds = array<i64: 128, 32>}, {pipeline_mode = #tpu.pipeline_mode<synchronous>, transform_indices = @transform_10, window_bounds = array<i64: 1, 32>}, {transform_indices = @transform_11, window_bounds = array<i64: 1, 8, 32>}]} {
    %c0 = arith.constant 0 : index
    %c0_0 = arith.constant 0 : index
    %c0_1 = arith.constant 0 : index
    %0 = vector.load %arg1[%c0, %c0_0, %c0_1] : memref<1x8x32xf32, #tpu.memory_space<vmem>>, vector<1x8x32xf32>
    %1 = vector.shape_cast %0 : vector<1x8x32xf32> to vector<8x32xf32>
    %c0_2 = arith.constant 0 : index
    %c0_3 = arith.constant 0 : index
    %2 = vector.load %arg2[%c0_2, %c0_3] : memref<1x32xf32, #tpu.memory_space<vmem>>, vector<1x32xf32>
    %c0_4 = arith.constant 0 : index
    %c0_5 = arith.constant 0 : index
    %3 = vector.load %arg3[%c0_4, %c0_5] : memref<1x32xf32, #tpu.memory_space<vmem>>, vector<1x32xf32>
    %cst = arith.constant dense<0.000000e+00> : vector<8xf32>
    %4 = vector.multi_reduction <add>, %1, %cst [1] : vector<8x32xf32> to vector<8xf32>
    %5 = vector.shape_cast %4 : vector<8xf32> to vector<8x1xf32>
    %cst_6 = arith.constant 3.200000e+01 : f32
    %6 = vector.broadcast %cst_6 : f32 to vector<8x1xf32>
    %7 = arith.divf %5, %6 : vector<8x1xf32>
    %8 = vector.broadcast %7 : vector<8x1xf32> to vector<8x32xf32>
    %9 = arith.subf %1, %8 : vector<8x32xf32>
    %10 = arith.mulf %9, %9 : vector<8x32xf32>
    %cst_7 = arith.constant dense<0.000000e+00> : vector<8xf32>
    %11 = vector.multi_reduction <add>, %10, %cst_7 [1] : vector<8x32xf32> to vector<8xf32>
    %12 = vector.shape_cast %11 : vector<8xf32> to vector<8x1xf32>
    %cst_8 = arith.constant 3.200000e+01 : f32
    %13 = vector.broadcast %cst_8 : f32 to vector<8x1xf32>
    %14 = arith.divf %12, %13 : vector<8x1xf32>
    %15 = vector.broadcast %7 : vector<8x1xf32> to vector<8x32xf32>
    %16 = arith.subf %1, %15 : vector<8x32xf32>
    %cst_9 = arith.constant 9.99999974E-6 : f32
    %17 = vector.broadcast %cst_9 : f32 to vector<8x1xf32>
    %18 = arith.addf %14, %17 : vector<8x1xf32>
    %19 = math.rsqrt %18 : vector<8x1xf32>
    %20 = vector.broadcast %19 : vector<8x1xf32> to vector<8x32xf32>
    %21 = arith.mulf %16, %20 : vector<8x32xf32>
    %22 = vector.broadcast %2 : vector<1x32xf32> to vector<8x32xf32>
    %23 = arith.mulf %21, %22 : vector<8x32xf32>
    %24 = vector.broadcast %3 : vector<1x32xf32> to vector<8x32xf32>
    %25 = arith.addf %23, %24 : vector<8x32xf32>
    %26 = arith.truncf %25 : vector<8x32xf32> to vector<8x32xbf16>
    %c0_10 = arith.constant 0 : index
    %c0_11 = arith.constant 0 : index
    %27 = vector.load %arg4[%c0_10, %c0_11] : memref<32x288xbf16, #tpu.memory_space<vmem>>, vector<32x288xbf16>
    %cst_12 = arith.constant dense<0.000000e+00> : vector<8x288xf32>
    %28 = tpu.matmul %26, %27, %cst_12 {dimension_numbers = #tpu.dot_dimension_numbers<[1], [0], [0], [1], [0, 0, 1, 1], [], []>} : vector<8x32xbf16>, vector<32x288xbf16>, vector<8x288xf32> -> vector<8x288xf32>
    %29 = arith.truncf %28 : vector<8x288xf32> to vector<8x288xbf16>
    %30 = tpu.iota {dimensions = array<i32: 0>} : vector<8x8xi32>
    %31 = tpu.iota {dimensions = array<i32: 1>} : vector<8x8xi32>
    %32 = arith.cmpi sge, %30, %31 : vector<8x8xi32>
    %cst_13 = arith.constant 0.000000e+00 : f32
    %cst_14 = arith.constant -1.000000e+30 : f32
    %33 = vector.broadcast %cst_13 : f32 to vector<8x8xf32>
    %34 = vector.broadcast %cst_14 : f32 to vector<8x8xf32>
    %35 = arith.select %32, %33, %34 : vector<8x8xi1>, vector<8x8xf32>
    %cst_15 = arith.constant 0.000000e+00 : f32
    %36 = vector.broadcast %cst_15 : f32 to vector<1x8x32xf32>
    %37 = vector.extract_strided_slice %29 {offsets = [0, 0], sizes = [8, 8], strides = [1, 1]} : vector<8x288xbf16> to vector<8x8xbf16>
    %38 = vector.shape_cast %37 : vector<8x8xbf16> to vector<1x8x8xbf16>
    %39 = vector.extract_strided_slice %29 {offsets = [0, 48], sizes = [8, 8], strides = [1, 1]} : vector<8x288xbf16> to vector<8x8xbf16>
    %40 = vector.shape_cast %39 : vector<8x8xbf16> to vector<1x8x8xbf16>
    %41 = vector.extract_strided_slice %29 {offsets = [0, 96], sizes = [8, 32], strides = [1, 1]} : vector<8x288xbf16> to vector<8x32xbf16>
    %42 = vector.shape_cast %41 : vector<8x32xbf16> to vector<1x8x32xbf16>
    %cst_16 = arith.constant dense<0.000000e+00> : vector<1x8x8xf32>
    %43 = tpu.matmul %38, %40, %cst_16 {dimension_numbers = #tpu.dot_dimension_numbers<[2], [2], [1], [1], [0, 0, 0, 1, 1, 1], [0], [0]>} : vector<1x8x8xbf16>, vector<1x8x8xbf16>, vector<1x8x8xf32> -> vector<1x8x8xf32>
    %44 = vector.shape_cast %35 : vector<8x8xf32> to vector<1x8x8xf32>
    %45 = arith.addf %43, %44 : vector<1x8x8xf32>
    %cst_17 = arith.constant dense<0xFF800000> : vector<1x8xf32>
    %46 = vector.multi_reduction <maximumf>, %45, %cst_17 [2] : vector<1x8x8xf32> to vector<1x8xf32>
    %47 = vector.shape_cast %46 : vector<1x8xf32> to vector<1x8x1xf32>
    %48 = vector.broadcast %47 : vector<1x8x1xf32> to vector<1x8x8xf32>
    %49 = arith.subf %45, %48 : vector<1x8x8xf32>
    %50 = math.exp %49 : vector<1x8x8xf32>
    %cst_18 = arith.constant dense<0.000000e+00> : vector<1x8xf32>
    %51 = vector.multi_reduction <add>, %50, %cst_18 [2] : vector<1x8x8xf32> to vector<1x8xf32>
    %52 = vector.shape_cast %51 : vector<1x8xf32> to vector<1x8x1xf32>
    %53 = arith.truncf %50 : vector<1x8x8xf32> to vector<1x8x8xbf16>
    %cst_19 = arith.constant dense<0.000000e+00> : vector<1x8x32xf32>
    %54 = tpu.matmul %53, %42, %cst_19 {dimension_numbers = #tpu.dot_dimension_numbers<[2], [1], [1], [2], [0, 0, 0, 1, 1, 2], [0], [0]>} : vector<1x8x8xbf16>, vector<1x8x32xbf16>, vector<1x8x32xf32> -> vector<1x8x32xf32>
    %55 = tpu.reciprocal %52 {approx = true} : vector<1x8x1xf32> -> vector<1x8x1xf32>
    %56 = vector.broadcast %55 : vector<1x8x1xf32> to vector<1x8x32xf32>
    %57 = arith.mulf %54, %56 : vector<1x8x32xf32>
    %58 = arith.addf %36, %57 : vector<1x8x32xf32>
    %59 = vector.extract_strided_slice %29 {offsets = [0, 8], sizes = [8, 8], strides = [1, 1]} : vector<8x288xbf16> to vector<8x8xbf16>
    %60 = vector.shape_cast %59 : vector<8x8xbf16> to vector<1x8x8xbf16>
    %61 = vector.extract_strided_slice %29 {offsets = [0, 56], sizes = [8, 8], strides = [1, 1]} : vector<8x288xbf16> to vector<8x8xbf16>
    %62 = vector.shape_cast %61 : vector<8x8xbf16> to vector<1x8x8xbf16>
    %63 = vector.extract_strided_slice %29 {offsets = [0, 128], sizes = [8, 32], strides = [1, 1]} : vector<8x288xbf16> to vector<8x32xbf16>
    %64 = vector.shape_cast %63 : vector<8x32xbf16> to vector<1x8x32xbf16>
    %cst_20 = arith.constant dense<0.000000e+00> : vector<1x8x8xf32>
    %65 = tpu.matmul %60, %62, %cst_20 {dimension_numbers = #tpu.dot_dimension_numbers<[2], [2], [1], [1], [0, 0, 0, 1, 1, 1], [0], [0]>} : vector<1x8x8xbf16>, vector<1x8x8xbf16>, vector<1x8x8xf32> -> vector<1x8x8xf32>
    %66 = vector.shape_cast %35 : vector<8x8xf32> to vector<1x8x8xf32>
    %67 = arith.addf %65, %66 : vector<1x8x8xf32>
    %cst_21 = arith.constant dense<0xFF800000> : vector<1x8xf32>
    %68 = vector.multi_reduction <maximumf>, %67, %cst_21 [2] : vector<1x8x8xf32> to vector<1x8xf32>
    %69 = vector.shape_cast %68 : vector<1x8xf32> to vector<1x8x1xf32>
    %70 = vector.broadcast %69 : vector<1x8x1xf32> to vector<1x8x8xf32>
    %71 = arith.subf %67, %70 : vector<1x8x8xf32>
    %72 = math.exp %71 : vector<1x8x8xf32>
    %cst_22 = arith.constant dense<0.000000e+00> : vector<1x8xf32>
    %73 = vector.multi_reduction <add>, %72, %cst_22 [2] : vector<1x8x8xf32> to vector<1x8xf32>
    %74 = vector.shape_cast %73 : vector<1x8xf32> to vector<1x8x1xf32>
    %75 = arith.truncf %72 : vector<1x8x8xf32> to vector<1x8x8xbf16>
    %cst_23 = arith.constant dense<0.000000e+00> : vector<1x8x32xf32>
    %76 = tpu.matmul %75, %64, %cst_23 {dimension_numbers = #tpu.dot_dimension_numbers<[2], [1], [1], [2], [0, 0, 0, 1, 1, 2], [0], [0]>} : vector<1x8x8xbf16>, vector<1x8x32xbf16>, vector<1x8x32xf32> -> vector<1x8x32xf32>
    %77 = tpu.reciprocal %74 {approx = true} : vector<1x8x1xf32> -> vector<1x8x1xf32>
    %78 = vector.broadcast %77 : vector<1x8x1xf32> to vector<1x8x32xf32>
    %79 = arith.mulf %76, %78 : vector<1x8x32xf32>
    %80 = arith.addf %58, %79 : vector<1x8x32xf32>
    %81 = vector.extract_strided_slice %29 {offsets = [0, 16], sizes = [8, 8], strides = [1, 1]} : vector<8x288xbf16> to vector<8x8xbf16>
    %82 = vector.shape_cast %81 : vector<8x8xbf16> to vector<1x8x8xbf16>
    %83 = vector.extract_strided_slice %29 {offsets = [0, 64], sizes = [8, 8], strides = [1, 1]} : vector<8x288xbf16> to vector<8x8xbf16>
    %84 = vector.shape_cast %83 : vector<8x8xbf16> to vector<1x8x8xbf16>
    %85 = vector.extract_strided_slice %29 {offsets = [0, 160], sizes = [8, 32], strides = [1, 1]} : vector<8x288xbf16> to vector<8x32xbf16>
    %86 = vector.shape_cast %85 : vector<8x32xbf16> to vector<1x8x32xbf16>
    %cst_24 = arith.constant dense<0.000000e+00> : vector<1x8x8xf32>
    %87 = tpu.matmul %82, %84, %cst_24 {dimension_numbers = #tpu.dot_dimension_numbers<[2], [2], [1], [1], [0, 0, 0, 1, 1, 1], [0], [0]>} : vector<1x8x8xbf16>, vector<1x8x8xbf16>, vector<1x8x8xf32> -> vector<1x8x8xf32>
    %88 = vector.shape_cast %35 : vector<8x8xf32> to vector<1x8x8xf32>
    %89 = arith.addf %87, %88 : vector<1x8x8xf32>
    %cst_25 = arith.constant dense<0xFF800000> : vector<1x8xf32>
    %90 = vector.multi_reduction <maximumf>, %89, %cst_25 [2] : vector<1x8x8xf32> to vector<1x8xf32>
    %91 = vector.shape_cast %90 : vector<1x8xf32> to vector<1x8x1xf32>
    %92 = vector.broadcast %91 : vector<1x8x1xf32> to vector<1x8x8xf32>
    %93 = arith.subf %89, %92 : vector<1x8x8xf32>
    %94 = math.exp %93 : vector<1x8x8xf32>
    %cst_26 = arith.constant dense<0.000000e+00> : vector<1x8xf32>
    %95 = vector.multi_reduction <add>, %94, %cst_26 [2] : vector<1x8x8xf32> to vector<1x8xf32>
    %96 = vector.shape_cast %95 : vector<1x8xf32> to vector<1x8x1xf32>
    %97 = arith.truncf %94 : vector<1x8x8xf32> to vector<1x8x8xbf16>
    %cst_27 = arith.constant dense<0.000000e+00> : vector<1x8x32xf32>
    %98 = tpu.matmul %97, %86, %cst_27 {dimension_numbers = #tpu.dot_dimension_numbers<[2], [1], [1], [2], [0, 0, 0, 1, 1, 2], [0], [0]>} : vector<1x8x8xbf16>, vector<1x8x32xbf16>, vector<1x8x32xf32> -> vector<1x8x32xf32>
    %99 = tpu.reciprocal %96 {approx = true} : vector<1x8x1xf32> -> vector<1x8x1xf32>
    %100 = vector.broadcast %99 : vector<1x8x1xf32> to vector<1x8x32xf32>
    %101 = arith.mulf %98, %100 : vector<1x8x32xf32>
    %102 = arith.addf %80, %101 : vector<1x8x32xf32>
    %103 = vector.extract_strided_slice %29 {offsets = [0, 24], sizes = [8, 8], strides = [1, 1]} : vector<8x288xbf16> to vector<8x8xbf16>
    %104 = vector.shape_cast %103 : vector<8x8xbf16> to vector<1x8x8xbf16>
    %105 = vector.extract_strided_slice %29 {offsets = [0, 72], sizes = [8, 8], strides = [1, 1]} : vector<8x288xbf16> to vector<8x8xbf16>
    %106 = vector.shape_cast %105 : vector<8x8xbf16> to vector<1x8x8xbf16>
    %107 = vector.extract_strided_slice %29 {offsets = [0, 192], sizes = [8, 32], strides = [1, 1]} : vector<8x288xbf16> to vector<8x32xbf16>
    %108 = vector.shape_cast %107 : vector<8x32xbf16> to vector<1x8x32xbf16>
    %cst_28 = arith.constant dense<0.000000e+00> : vector<1x8x8xf32>
    %109 = tpu.matmul %104, %106, %cst_28 {dimension_numbers = #tpu.dot_dimension_numbers<[2], [2], [1], [1], [0, 0, 0, 1, 1, 1], [0], [0]>} : vector<1x8x8xbf16>, vector<1x8x8xbf16>, vector<1x8x8xf32> -> vector<1x8x8xf32>
    %110 = vector.shape_cast %35 : vector<8x8xf32> to vector<1x8x8xf32>
    %111 = arith.addf %109, %110 : vector<1x8x8xf32>
    %cst_29 = arith.constant dense<0xFF800000> : vector<1x8xf32>
    %112 = vector.multi_reduction <maximumf>, %111, %cst_29 [2] : vector<1x8x8xf32> to vector<1x8xf32>
    %113 = vector.shape_cast %112 : vector<1x8xf32> to vector<1x8x1xf32>
    %114 = vector.broadcast %113 : vector<1x8x1xf32> to vector<1x8x8xf32>
    %115 = arith.subf %111, %114 : vector<1x8x8xf32>
    %116 = math.exp %115 : vector<1x8x8xf32>
    %cst_30 = arith.constant dense<0.000000e+00> : vector<1x8xf32>
    %117 = vector.multi_reduction <add>, %116, %cst_30 [2] : vector<1x8x8xf32> to vector<1x8xf32>
    %118 = vector.shape_cast %117 : vector<1x8xf32> to vector<1x8x1xf32>
    %119 = arith.truncf %116 : vector<1x8x8xf32> to vector<1x8x8xbf16>
    %cst_31 = arith.constant dense<0.000000e+00> : vector<1x8x32xf32>
    %120 = tpu.matmul %119, %108, %cst_31 {dimension_numbers = #tpu.dot_dimension_numbers<[2], [1], [1], [2], [0, 0, 0, 1, 1, 2], [0], [0]>} : vector<1x8x8xbf16>, vector<1x8x32xbf16>, vector<1x8x32xf32> -> vector<1x8x32xf32>
    %121 = tpu.reciprocal %118 {approx = true} : vector<1x8x1xf32> -> vector<1x8x1xf32>
    %122 = vector.broadcast %121 : vector<1x8x1xf32> to vector<1x8x32xf32>
    %123 = arith.mulf %120, %122 : vector<1x8x32xf32>
    %124 = arith.addf %102, %123 : vector<1x8x32xf32>
    %125 = vector.extract_strided_slice %29 {offsets = [0, 32], sizes = [8, 8], strides = [1, 1]} : vector<8x288xbf16> to vector<8x8xbf16>
    %126 = vector.shape_cast %125 : vector<8x8xbf16> to vector<1x8x8xbf16>
    %127 = vector.extract_strided_slice %29 {offsets = [0, 80], sizes = [8, 8], strides = [1, 1]} : vector<8x288xbf16> to vector<8x8xbf16>
    %128 = vector.shape_cast %127 : vector<8x8xbf16> to vector<1x8x8xbf16>
    %129 = vector.extract_strided_slice %29 {offsets = [0, 224], sizes = [8, 32], strides = [1, 1]} : vector<8x288xbf16> to vector<8x32xbf16>
    %130 = vector.shape_cast %129 : vector<8x32xbf16> to vector<1x8x32xbf16>
    %cst_32 = arith.constant dense<0.000000e+00> : vector<1x8x8xf32>
    %131 = tpu.matmul %126, %128, %cst_32 {dimension_numbers = #tpu.dot_dimension_numbers<[2], [2], [1], [1], [0, 0, 0, 1, 1, 1], [0], [0]>} : vector<1x8x8xbf16>, vector<1x8x8xbf16>, vector<1x8x8xf32> -> vector<1x8x8xf32>
    %132 = vector.shape_cast %35 : vector<8x8xf32> to vector<1x8x8xf32>
    %133 = arith.addf %131, %132 : vector<1x8x8xf32>
    %cst_33 = arith.constant dense<0xFF800000> : vector<1x8xf32>
    %134 = vector.multi_reduction <maximumf>, %133, %cst_33 [2] : vector<1x8x8xf32> to vector<1x8xf32>
    %135 = vector.shape_cast %134 : vector<1x8xf32> to vector<1x8x1xf32>
    %136 = vector.broadcast %135 : vector<1x8x1xf32> to vector<1x8x8xf32>
    %137 = arith.subf %133, %136 : vector<1x8x8xf32>
    %138 = math.exp %137 : vector<1x8x8xf32>
    %cst_34 = arith.constant dense<0.000000e+00> : vector<1x8xf32>
    %139 = vector.multi_reduction <add>, %138, %cst_34 [2] : vector<1x8x8xf32> to vector<1x8xf32>
    %140 = vector.shape_cast %139 : vector<1x8xf32> to vector<1x8x1xf32>
    %141 = arith.truncf %138 : vector<1x8x8xf32> to vector<1x8x8xbf16>
    %cst_35 = arith.constant dense<0.000000e+00> : vector<1x8x32xf32>
    %142 = tpu.matmul %141, %130, %cst_35 {dimension_numbers = #tpu.dot_dimension_numbers<[2], [1], [1], [2], [0, 0, 0, 1, 1, 2], [0], [0]>} : vector<1x8x8xbf16>, vector<1x8x32xbf16>, vector<1x8x32xf32> -> vector<1x8x32xf32>
    %143 = tpu.reciprocal %140 {approx = true} : vector<1x8x1xf32> -> vector<1x8x1xf32>
    %144 = vector.broadcast %143 : vector<1x8x1xf32> to vector<1x8x32xf32>
    %145 = arith.mulf %142, %144 : vector<1x8x32xf32>
    %146 = arith.addf %124, %145 : vector<1x8x32xf32>
    %147 = vector.extract_strided_slice %29 {offsets = [0, 40], sizes = [8, 8], strides = [1, 1]} : vector<8x288xbf16> to vector<8x8xbf16>
    %148 = vector.shape_cast %147 : vector<8x8xbf16> to vector<1x8x8xbf16>
    %149 = vector.extract_strided_slice %29 {offsets = [0, 88], sizes = [8, 8], strides = [1, 1]} : vector<8x288xbf16> to vector<8x8xbf16>
    %150 = vector.shape_cast %149 : vector<8x8xbf16> to vector<1x8x8xbf16>
    %151 = vector.extract_strided_slice %29 {offsets = [0, 256], sizes = [8, 32], strides = [1, 1]} : vector<8x288xbf16> to vector<8x32xbf16>
    %152 = vector.shape_cast %151 : vector<8x32xbf16> to vector<1x8x32xbf16>
    %cst_36 = arith.constant dense<0.000000e+00> : vector<1x8x8xf32>
    %153 = tpu.matmul %148, %150, %cst_36 {dimension_numbers = #tpu.dot_dimension_numbers<[2], [2], [1], [1], [0, 0, 0, 1, 1, 1], [0], [0]>} : vector<1x8x8xbf16>, vector<1x8x8xbf16>, vector<1x8x8xf32> -> vector<1x8x8xf32>
    %154 = vector.shape_cast %35 : vector<8x8xf32> to vector<1x8x8xf32>
    %155 = arith.addf %153, %154 : vector<1x8x8xf32>
    %cst_37 = arith.constant dense<0xFF800000> : vector<1x8xf32>
    %156 = vector.multi_reduction <maximumf>, %155, %cst_37 [2] : vector<1x8x8xf32> to vector<1x8xf32>
    %157 = vector.shape_cast %156 : vector<1x8xf32> to vector<1x8x1xf32>
    %158 = vector.broadcast %157 : vector<1x8x1xf32> to vector<1x8x8xf32>
    %159 = arith.subf %155, %158 : vector<1x8x8xf32>
    %160 = math.exp %159 : vector<1x8x8xf32>
    %cst_38 = arith.constant dense<0.000000e+00> : vector<1x8xf32>
    %161 = vector.multi_reduction <add>, %160, %cst_38 [2] : vector<1x8x8xf32> to vector<1x8xf32>
    %162 = vector.shape_cast %161 : vector<1x8xf32> to vector<1x8x1xf32>
    %163 = arith.truncf %160 : vector<1x8x8xf32> to vector<1x8x8xbf16>
    %cst_39 = arith.constant dense<0.000000e+00> : vector<1x8x32xf32>
    %164 = tpu.matmul %163, %152, %cst_39 {dimension_numbers = #tpu.dot_dimension_numbers<[2], [1], [1], [2], [0, 0, 0, 1, 1, 2], [0], [0]>} : vector<1x8x8xbf16>, vector<1x8x32xbf16>, vector<1x8x32xf32> -> vector<1x8x32xf32>
    %165 = tpu.reciprocal %162 {approx = true} : vector<1x8x1xf32> -> vector<1x8x1xf32>
    %166 = vector.broadcast %165 : vector<1x8x1xf32> to vector<1x8x32xf32>
    %167 = arith.mulf %164, %166 : vector<1x8x32xf32>
    %168 = arith.addf %146, %167 : vector<1x8x32xf32>
    %169 = vector.shape_cast %168 : vector<1x8x32xf32> to vector<8x32xf32>
    %170 = arith.addf %1, %169 : vector<8x32xf32>
    %c0_40 = arith.constant 0 : index
    %c0_41 = arith.constant 0 : index
    %171 = vector.load %arg5[%c0_40, %c0_41] : memref<1x32xf32, #tpu.memory_space<vmem>>, vector<1x32xf32>
    %172 = vector.broadcast %171 : vector<1x32xf32> to vector<8x32xf32>
    %173 = arith.addf %170, %172 : vector<8x32xf32>
    %c0_42 = arith.constant 0 : index
    %c0_43 = arith.constant 0 : index
    %174 = vector.load %arg6[%c0_42, %c0_43] : memref<1x32xf32, #tpu.memory_space<vmem>>, vector<1x32xf32>
    %c0_44 = arith.constant 0 : index
    %c0_45 = arith.constant 0 : index
    %175 = vector.load %arg7[%c0_44, %c0_45] : memref<1x32xf32, #tpu.memory_space<vmem>>, vector<1x32xf32>
    %cst_46 = arith.constant dense<0.000000e+00> : vector<8xf32>
    %176 = vector.multi_reduction <add>, %173, %cst_46 [1] : vector<8x32xf32> to vector<8xf32>
    %177 = vector.shape_cast %176 : vector<8xf32> to vector<8x1xf32>
    %cst_47 = arith.constant 3.200000e+01 : f32
    %178 = vector.broadcast %cst_47 : f32 to vector<8x1xf32>
    %179 = arith.divf %177, %178 : vector<8x1xf32>
    %180 = vector.broadcast %179 : vector<8x1xf32> to vector<8x32xf32>
    %181 = arith.subf %173, %180 : vector<8x32xf32>
    %182 = arith.mulf %181, %181 : vector<8x32xf32>
    %cst_48 = arith.constant dense<0.000000e+00> : vector<8xf32>
    %183 = vector.multi_reduction <add>, %182, %cst_48 [1] : vector<8x32xf32> to vector<8xf32>
    %184 = vector.shape_cast %183 : vector<8xf32> to vector<8x1xf32>
    %cst_49 = arith.constant 3.200000e+01 : f32
    %185 = vector.broadcast %cst_49 : f32 to vector<8x1xf32>
    %186 = arith.divf %184, %185 : vector<8x1xf32>
    %187 = vector.broadcast %179 : vector<8x1xf32> to vector<8x32xf32>
    %188 = arith.subf %173, %187 : vector<8x32xf32>
    %cst_50 = arith.constant 9.99999974E-6 : f32
    %189 = vector.broadcast %cst_50 : f32 to vector<8x1xf32>
    %190 = arith.addf %186, %189 : vector<8x1xf32>
    %191 = math.rsqrt %190 : vector<8x1xf32>
    %192 = vector.broadcast %191 : vector<8x1xf32> to vector<8x32xf32>
    %193 = arith.mulf %188, %192 : vector<8x32xf32>
    %194 = vector.broadcast %174 : vector<1x32xf32> to vector<8x32xf32>
    %195 = arith.mulf %193, %194 : vector<8x32xf32>
    %196 = vector.broadcast %175 : vector<1x32xf32> to vector<8x32xf32>
    %197 = arith.addf %195, %196 : vector<8x32xf32>
    %198 = arith.truncf %197 : vector<8x32xf32> to vector<8x32xbf16>
    %c0_51 = arith.constant 0 : index
    %c0_52 = arith.constant 0 : index
    %199 = vector.load %arg8[%c0_51, %c0_52] : memref<32x128xbf16, #tpu.memory_space<vmem>>, vector<32x128xbf16>
    %cst_53 = arith.constant dense<0.000000e+00> : vector<8x128xf32>
    %200 = tpu.matmul %198, %199, %cst_53 {dimension_numbers = #tpu.dot_dimension_numbers<[1], [0], [0], [1], [0, 0, 1, 1], [], []>} : vector<8x32xbf16>, vector<32x128xbf16>, vector<8x128xf32> -> vector<8x128xf32>
    %c0_54 = arith.constant 0 : index
    %c0_55 = arith.constant 0 : index
    %201 = vector.load %arg9[%c0_54, %c0_55] : memref<1x128xf32, #tpu.memory_space<vmem>>, vector<1x128xf32>
    %202 = vector.broadcast %201 : vector<1x128xf32> to vector<8x128xf32>
    %203 = arith.addf %200, %202 : vector<8x128xf32>
    %cst_56 = arith.constant 0.000000e+00 : f32
    %204 = vector.broadcast %cst_56 : f32 to vector<8x128xf32>
    %205 = arith.maximumf %203, %204 : vector<8x128xf32>
    %206 = arith.truncf %205 : vector<8x128xf32> to vector<8x128xbf16>
    %c0_57 = arith.constant 0 : index
    %c0_58 = arith.constant 0 : index
    %207 = vector.load %arg10[%c0_57, %c0_58] : memref<128x32xbf16, #tpu.memory_space<vmem>>, vector<128x32xbf16>
    %cst_59 = arith.constant dense<0.000000e+00> : vector<8x32xf32>
    %208 = tpu.matmul %206, %207, %cst_59 {dimension_numbers = #tpu.dot_dimension_numbers<[1], [0], [0], [1], [0, 0, 1, 1], [], []>} : vector<8x128xbf16>, vector<128x32xbf16>, vector<8x32xf32> -> vector<8x32xf32>
    %c0_60 = arith.constant 0 : index
    %c0_61 = arith.constant 0 : index
    %209 = vector.load %arg11[%c0_60, %c0_61] : memref<1x32xf32, #tpu.memory_space<vmem>>, vector<1x32xf32>
    %210 = vector.broadcast %209 : vector<1x32xf32> to vector<8x32xf32>
    %211 = arith.addf %208, %210 : vector<8x32xf32>
    %212 = arith.addf %173, %211 : vector<8x32xf32>
    %213 = vector.shape_cast %212 : vector<8x32xf32> to vector<1x8x32xf32>
    %c0_62 = arith.constant 0 : index
    %c0_63 = arith.constant 0 : index
    %c0_64 = arith.constant 0 : index
    %214 = vector.load %arg12[%c0_62, %c0_63, %c0_64] : memref<1x8x32xf32, #tpu.memory_space<vmem>>, vector<1x8x32xf32>
    tpu.vector_store %arg12[%c0_62, %c0_63, %c0_64], %213 {strides = array<i32>} : memref<1x8x32xf32, #tpu.memory_space<vmem>>, vector<1x8x32xf32>,
    return
  }
  func.func @transform_0(%arg0: i32) -> (i32, i32, i32) {
    %c0_i32 = arith.constant 0 : i32
    %c0_i32_0 = arith.constant 0 : i32
    %c0_i32_1 = arith.constant 0 : i32
    return %arg0, %c0_i32, %c0_i32_0 : i32, i32, i32
  }
  func.func @transform_1(%arg0: i32) -> (i32, i32) {
    %c0_i32 = arith.constant 0 : i32
    %c0_i32_0 = arith.constant 0 : i32
    %c0_i32_1 = arith.constant 0 : i32
    return %c0_i32, %c0_i32_0 : i32, i32
  }
  func.func @transform_2(%arg0: i32) -> (i32, i32) {
    %c0_i32 = arith.constant 0 : i32
    %c0_i32_0 = arith.constant 0 : i32
    %c0_i32_1 = arith.constant 0 : i32
    return %c0_i32, %c0_i32_0 : i32, i32
  }
  func.func @transform_3(%arg0: i32) -> (i32, i32) {
    %c0_i32 = arith.constant 0 : i32
    %c0_i32_0 = arith.constant 0 : i32
    %c0_i32_1 = arith.constant 0 : i32
    return %c0_i32, %c0_i32_0 : i32, i32
  }
  func.func @transform_4(%arg0: i32) -> (i32, i32) {
    %c0_i32 = arith.constant 0 : i32
    %c0_i32_0 = arith.constant 0 : i32
    %c0_i32_1 = arith.constant 0 : i32
    return %c0_i32, %c0_i32_0 : i32, i32
  }
  func.func @transform_5(%arg0: i32) -> (i32, i32) {
    %c0_i32 = arith.constant 0 : i32
    %c0_i32_0 = arith.constant 0 : i32
    %c0_i32_1 = arith.constant 0 : i32
    return %c0_i32, %c0_i32_0 : i32, i32
  }
  func.func @transform_6(%arg0: i32) -> (i32, i32) {
    %c0_i32 = arith.constant 0 : i32
    %c0_i32_0 = arith.constant 0 : i32
    %c0_i32_1 = arith.constant 0 : i32
    return %c0_i32, %c0_i32_0 : i32, i32
  }
  func.func @transform_7(%arg0: i32) -> (i32, i32) {
    %c0_i32 = arith.constant 0 : i32
    %c0_i32_0 = arith.constant 0 : i32
    %c0_i32_1 = arith.constant 0 : i32
    return %c0_i32, %c0_i32_0 : i32, i32
  }
  func.func @transform_8(%arg0: i32) -> (i32, i32) {
    %c0_i32 = arith.constant 0 : i32
    %c0_i32_0 = arith.constant 0 : i32
    %c0_i32_1 = arith.constant 0 : i32
    return %c0_i32, %c0_i32_0 : i32, i32
  }
  func.func @transform_9(%arg0: i32) -> (i32, i32) {
    %c0_i32 = arith.constant 0 : i32
    %c0_i32_0 = arith.constant 0 : i32
    %c0_i32_1 = arith.constant 0 : i32
    return %c0_i32, %c0_i32_0 : i32, i32
  }
  func.func @transform_10(%arg0: i32) -> (i32, i32) {
    %c0_i32 = arith.constant 0 : i32
    %c0_i32_0 = arith.constant 0 : i32
    %c0_i32_1 = arith.constant 0 : i32
    return %c0_i32, %c0_i32_0 : i32, i32
  }
  func.func @transform_11(%arg0: i32) -> (i32, i32, i32) {
    %c0_i32 = arith.constant 0 : i32
    %c0_i32_0 = arith.constant 0 : i32
    %c0_i32_1 = arith.constant 0 : i32
    return %arg0, %c0_i32, %c0_i32_0 : i32, i32, i32
  }
}

</mosaic_0001>

<llo_original>
// kernel: tpu_custom_call.1
$region0: #{tpu_custom_call.1}
  #allocation0 [shape = 'u32[]', space=smem, size = 0x4, offset = 0x4, fixed_abs, tag = 'smem constant byte address 0x4 - core index']
  #allocation1 [shape = 'u32[144,128]{1,0:T(1,128)}', space=vmem, size = 0x12000, scoped, tag = 'internal scratch']
  %s0 = inlined_call_operand.vmem [shape: f32[2,8,32], index: 0, kind: input, shape index: {}]
  %s1 = inlined_call_operand.vmem [shape: f32[1,32], index: 1, kind: input, shape index: {}]
  %s2 = inlined_call_operand.vmem [shape: f32[1,32], index: 2, kind: input, shape index: {}]
  %s3 = inlined_call_operand.vmem [shape: bf16[32,288], index: 3, kind: input, shape index: {}]
  %s4 = inlined_call_operand.vmem [shape: f32[1,32], index: 4, kind: input, shape index: {}]
  %s5 = inlined_call_operand.vmem [shape: f32[1,32], index: 5, kind: input, shape index: {}]
  %s6 = inlined_call_operand.vmem [shape: f32[1,32], index: 6, kind: input, shape index: {}]
  %s7 = inlined_call_operand.vmem [shape: bf16[32,128], index: 7, kind: input, shape index: {}]
  %s8 = inlined_call_operand.vmem [shape: f32[1,128], index: 8, kind: input, shape index: {}]
  %s9 = inlined_call_operand.vmem [shape: bf16[128,32], index: 9, kind: input, shape index: {}]
  %s10 = inlined_call_operand.vmem [shape: f32[1,32], index: 10, kind: input, shape index: {}]
  %s11 = inlined_call_operand.hbm [shape: f32[2,8,32], index: 11, kind: output, shape index: {}]
  %s12 = sld [smem:[#allocation0]]
  $region77: #{tpu_custom_call.1} parent=0
    _
  %s14 = ssub.s32 1, %s12
  %s15 = scalar_select 0, %s14, %s12
  $region1: #{tpu_custom_call.1} parent=0
    #allocation2 [shape = 'u8[8192]{0}', space=vmem, size = 0x2000, scoped, tag = 'output window, operand 0']
    #allocation3 [shape = 's32[2]{0}', space=sflag, size = 0x8, scoped, tag = 'scoped memory for tpu_custom_call.1']
    %16 = vsyncpa [#allocation3], 0
    %s17 = scalar_lea.sflag [#allocation3], 1
    %18 = vsyncpa %s17, 0
    loop: start=0, step=1, limit=4
    $region2: #{tpu_custom_call.1} parent=1 // loop_pre_header
      _
    $region3: #{tpu_custom_call.1} parent=1 // loop_header
      %s20 = sphi 0, %s24
      %p21 = scmp.ge.s32.totalorder %s20, 4
      %s30 = sphi 0, %s32
      %s33 = sphi 0, %s30
      %s34 = sphi 0, %s33
      %s50 = sphi 0, %s34
      %s54 = sphi 0, %s54
      %s56 = sphi 0, %s54
      %s57 = sphi 0, %s56
      %s71 = sphi 0, %s57
      %s75 = sphi 0, %s75
      %s77 = sphi 0, %s75
      %s78 = sphi 0, %s77
      %s92 = sphi 0, %s78
      %s96 = sphi 0, %s96
      %s98 = sphi 0, %s96
      %s99 = sphi 0, %s98
      %s113 = sphi 0, %s99
      %s117 = sphi 0, %s117
      %s119 = sphi 0, %s117
      %s120 = sphi 0, %s119
      %s134 = sphi 0, %s120
      %s138 = sphi 0, %s138
      %s140 = sphi 0, %s138
      %s141 = sphi 0, %s140
      %s155 = sphi 0, %s141
      %s159 = sphi 0, %s159
      %s161 = sphi 0, %s159
      %s162 = sphi 0, %s161
      %s176 = sphi 0, %s162
      %s180 = sphi 0, %s180
      %s182 = sphi 0, %s180
      %s183 = sphi 0, %s182
      %s197 = sphi 0, %s183
      %s201 = sphi 0, %s201
      %s203 = sphi 0, %s201
      %s204 = sphi 0, %s203
      %s218 = sphi 0, %s204
      %s222 = sphi 0, %s222
      %s224 = sphi 0, %s222
      %s225 = sphi 0, %s224
      %s239 = sphi 0, %s225
      %s243 = sphi 0, %s243
      %s245 = sphi 0, %s243
      %s246 = sphi 0, %s245
      %s260 = sphi 0, %s246
      %s266 = sphi 0, %s268
      %s269 = sphi 0, %s266
      %s270 = sphi 0, %s269
      %s286 = sphi 0, %s270
    $region4: #{tpu_custom_call.1} parent=1 // loop_header_branch
      %23 = sbr.rel (%p21) target = $region8
    $region5: #{tpu_custom_call.1} parent=1 // loop_body
      %s25 = ssub.s32 %s20, 1
      %s26 = ssub.s32 %s20, 2
      %s27 = sadd.s32 %s20, 1
      %s28 = ssub.s32 %s20, %s27
      %p29 = scmp.eq.s32.totalorder %s28, 0
      %s31 = sadd.s32 %s30, 1
      %s32 = scalar_select %p29, %s30, %s31
      %p35 = pneg %p29
      %p36 = scmp.eq.s32.totalorder %s20, 1
      %p37 = por %p35, %p36
      %p38 = scmp.ne.s32.totalorder %s30, %s33
      %p39 = scmp.eq.s32.totalorder %s20, 0
      %p40 = por %p38, %p39
      %p41 = scmp.ne.s32.totalorder %s30, %s33
      %p42 = scmp.eq.s32.totalorder %s25, 1
      %p43 = por %p41, %p42
      %p44 = scmp.ne.s32.totalorder %s33, %s34
      %p45 = scmp.eq.s32.totalorder %s25, 0
      %p46 = por %p44, %p45
      %p47 = scmp.ne.s32.totalorder %s33, %s34
      %p48 = scmp.eq.s32.totalorder %s26, 1
      %p49 = por %p47, %p48
      %p51 = scmp.ne.s32.totalorder %s34, %s50
      %p52 = scmp.eq.s32.totalorder %s26, 0
      %p53 = por %p51, %p52
      %s55 = sadd.s32 %s54, 1
      %p58 = scmp.eq.s32.totalorder %s20, 1
      %p59 = scmp.ne.s32.totalorder %s54, %s56
      %p60 = scmp.eq.s32.totalorder %s20, 0
      %p61 = por %p59, %p60
      %p62 = scmp.ne.s32.totalorder %s54, %s56
      %p63 = scmp.eq.s32.totalorder %s25, 1
      %p64 = por %p62, %p63
      %p65 = scmp.ne.s32.totalorder %s56, %s57
      %p66 = scmp.eq.s32.totalorder %s25, 0
      %p67 = por %p65, %p66
      %p68 = scmp.ne.s32.totalorder %s56, %s57
      %p69 = scmp.eq.s32.totalorder %s26, 1
      %p70 = por %p68, %p69
      %p72 = scmp.ne.s32.totalorder %s57, %s71
      %p73 = scmp.eq.s32.totalorder %s26, 0
      %p74 = por %p72, %p73
      %s76 = sadd.s32 %s75, 1
      %p79 = scmp.eq.s32.totalorder %s20, 1
      %p80 = scmp.ne.s32.totalorder %s75, %s77
      %p81 = scmp.eq.s32.totalorder %s20, 0
      %p82 = por %p80, %p81
      %p83 = scmp.ne.s32.totalorder %s75, %s77
      %p84 = scmp.eq.s32.totalorder %s25, 1
      %p85 = por %p83, %p84
      %p86 = scmp.ne.s32.totalorder %s77, %s78
      %p87 = scmp.eq.s32.totalorder %s25, 0
      %p88 = por %p86, %p87
      %p89 = scmp.ne.s32.totalorder %s77, %s78
      %p90 = scmp.eq.s32.totalorder %s26, 1
      %p91 = por %p89, %p90
      %p93 = scmp.ne.s32.totalorder %s78, %s92
      %p94 = scmp.eq.s32.totalorder %s26, 0
      %p95 = por %p93, %p94
      %s97 = sadd.s32 %s96, 1
      %p100 = scmp.eq.s32.totalorder %s20, 1
      %p101 = scmp.ne.s32.totalorder %s96, %s98
      %p102 = scmp.eq.s32.totalorder %s20, 0
      %p103 = por %p101, %p102
      %p104 = scmp.ne.s32.totalorder %s96, %s98
      %p105 = scmp.eq.s32.totalorder %s25, 1
      %p106 = por %p104, %p105
      %p107 = scmp.ne.s32.totalorder %s98, %s99
      %p108 = scmp.eq.s32.totalorder %s25, 0
      %p109 = por %p107, %p108
      %p110 = scmp.ne.s32.totalorder %s98, %s99
      %p111 = scmp.eq.s32.totalorder %s26, 1
      %p112 = por %p110, %p111
      %p114 = scmp.ne.s32.totalorder %s99, %s113
      %p115 = scmp.eq.s32.totalorder %s26, 0
      %p116 = por %p114, %p115
      %s118 = sadd.s32 %s117, 1
      %p121 = scmp.eq.s32.totalorder %s20, 1
      %p122 = scmp.ne.s32.totalorder %s117, %s119
      %p123 = scmp.eq.s32.totalorder %s20, 0
      %p124 = por %p122, %p123
      %p125 = scmp.ne.s32.totalorder %s117, %s119
      %p126 = scmp.eq.s32.totalorder %s25, 1
      %p127 = por %p125, %p126
      %p128 = scmp.ne.s32.totalorder %s119, %s120
      %p129 = scmp.eq.s32.totalorder %s25, 0
      %p130 = por %p128, %p129
      %p131 = scmp.ne.s32.totalorder %s119, %s120
      %p132 = scmp.eq.s32.totalorder %s26, 1
      %p133 = por %p131, %p132
      %p135 = scmp.ne.s32.totalorder %s120, %s134
      %p136 = scmp.eq.s32.totalorder %s26, 0
      %p137 = por %p135, %p136
      %s139 = sadd.s32 %s138, 1
      %p142 = scmp.eq.s32.totalorder %s20, 1
      %p143 = scmp.ne.s32.totalorder %s138, %s140
      %p144 = scmp.eq.s32.totalorder %s20, 0
      %p145 = por %p143, %p144
      %p146 = scmp.ne.s32.totalorder %s138, %s140
      %p147 = scmp.eq.s32.totalorder %s25, 1
      %p148 = por %p146, %p147
      %p149 = scmp.ne.s32.totalorder %s140, %s141
      %p150 = scmp.eq.s32.totalorder %s25, 0
      %p151 = por %p149, %p150
      %p152 = scmp.ne.s32.totalorder %s140, %s141
      %p153 = scmp.eq.s32.totalorder %s26, 1
      %p154 = por %p152, %p153
      %p156 = scmp.ne.s32.totalorder %s141, %s155
      %p157 = scmp.eq.s32.totalorder %s26, 0
      %p158 = por %p156, %p157
      %s160 = sadd.s32 %s159, 1
      %p163 = scmp.eq.s32.totalorder %s20, 1
      %p164 = scmp.ne.s32.totalorder %s159, %s161
      %p165 = scmp.eq.s32.totalorder %s20, 0
      %p166 = por %p164, %p165
      %p167 = scmp.ne.s32.totalorder %s159, %s161
      %p168 = scmp.eq.s32.totalorder %s25, 1
      %p169 = por %p167, %p168
      %p170 = scmp.ne.s32.totalorder %s161, %s162
      %p171 = scmp.eq.s32.totalorder %s25, 0
      %p172 = por %p170, %p171
      %p173 = scmp.ne.s32.totalorder %s161, %s162
      %p174 = scmp.eq.s32.totalorder %s26, 1
      %p175 = por %p173, %p174
      %p177 = scmp.ne.s32.totalorder %s162, %s176
      %p178 = scmp.eq.s32.totalorder %s26, 0
      %p179 = por %p177, %p178
      %s181 = sadd.s32 %s180, 1
      %p184 = scmp.eq.s32.totalorder %s20, 1
      %p185 = scmp.ne.s32.totalorder %s180, %s182
      %p186 = scmp.eq.s32.totalorder %s20, 0
      %p187 = por %p185, %p186
      %p188 = scmp.ne.s32.totalorder %s180, %s182
      %p189 = scmp.eq.s32.totalorder %s25, 1
      %p190 = por %p188, %p189
      %p191 = scmp.ne.s32.totalorder %s182, %s183
      %p192 = scmp.eq.s32.totalorder %s25, 0
      %p193 = por %p191, %p192
      %p194 = scmp.ne.s32.totalorder %s182, %s183
      %p195 = scmp.eq.s32.totalorder %s26, 1
      %p196 = por %p194, %p195
      %p198 = scmp.ne.s32.totalorder %s183, %s197
      %p199 = scmp.eq.s32.totalorder %s26, 0
      %p200 = por %p198, %p199
      %s202 = sadd.s32 %s201, 1
      %p205 = scmp.eq.s32.totalorder %s20, 1
      %p206 = scmp.ne.s32.totalorder %s201, %s203
      %p207 = scmp.eq.s32.totalorder %s20, 0
      %p208 = por %p206, %p207
      %p209 = scmp.ne.s32.totalorder %s201, %s203
      %p210 = scmp.eq.s32.totalorder %s25, 1
      %p211 = por %p209, %p210
      %p212 = scmp.ne.s32.totalorder %s203, %s204
      %p213 = scmp.eq.s32.totalorder %s25, 0
      %p214 = por %p212, %p213
      %p215 = scmp.ne.s32.totalorder %s203, %s204
      %p216 = scmp.eq.s32.totalorder %s26, 1
      %p217 = por %p215, %p216
      %p219 = scmp.ne.s32.totalorder %s204, %s218
      %p220 = scmp.eq.s32.totalorder %s26, 0
      %p221 = por %p219, %p220
      %s223 = sadd.s32 %s222, 1
      %p226 = scmp.eq.s32.totalorder %s20, 1
      %p227 = scmp.ne.s32.totalorder %s222, %s224
      %p228 = scmp.eq.s32.totalorder %s20, 0
      %p229 = por %p227, %p228
      %p230 = scmp.ne.s32.totalorder %s222, %s224
      %p231 = scmp.eq.s32.totalorder %s25, 1
      %p232 = por %p230, %p231
      %p233 = scmp.ne.s32.totalorder %s224, %s225
      %p234 = scmp.eq.s32.totalorder %s25, 0
      %p235 = por %p233, %p234
      %p236 = scmp.ne.s32.totalorder %s224, %s225
      %p237 = scmp.eq.s32.totalorder %s26, 1
      %p238 = por %p236, %p237
      %p240 = scmp.ne.s32.totalorder %s225, %s239
      %p241 = scmp.eq.s32.totalorder %s26, 0
      %p242 = por %p240, %p241
      %s244 = sadd.s32 %s243, 1
      %p247 = scmp.eq.s32.totalorder %s20, 1
      %p248 = scmp.ne.s32.totalorder %s243, %s245
      %p249 = scmp.eq.s32.totalorder %s20, 0
      %p250 = por %p248, %p249
      %p251 = scmp.ne.s32.totalorder %s243, %s245
      %p252 = scmp.eq.s32.totalorder %s25, 1
      %p253 = por %p251, %p252
      %p254 = scmp.ne.s32.totalorder %s245, %s246
      %p255 = scmp.eq.s32.totalorder %s25, 0
      %p256 = por %p254, %p255
      %p257 = scmp.ne.s32.totalorder %s245, %s246
      %p258 = scmp.eq.s32.totalorder %s26, 1
      %p259 = por %p257, %p258
      %p261 = scmp.ne.s32.totalorder %s246, %s260
      %p262 = scmp.eq.s32.totalorder %s26, 0
      %p263 = por %p261, %p262
      %s264 = ssub.s32 %s20, %s27
      %p265 = scmp.eq.s32.totalorder %s264, 0
      %s267 = sadd.s32 %s266, 1
      %s268 = scalar_select %p265, %s266, %s267
      %p271 = pneg %p265
      %p272 = scmp.eq.s32.totalorder %s20, 1
      %p273 = por %p271, %p272
      %p274 = scmp.ne.s32.totalorder %s266, %s269
      %p275 = scmp.eq.s32.totalorder %s20, 0
      %p276 = por %p274, %p275
      %p277 = scmp.ne.s32.totalorder %s266, %s269
      %p278 = scmp.eq.s32.totalorder %s25, 1
      %p279 = por %p277, %p278
      %p280 = scmp.ne.s32.totalorder %s269, %s270
      %p281 = scmp.eq.s32.totalorder %s25, 0
      %p282 = por %p280, %p281
      %p283 = scmp.ne.s32.totalorder %s269, %s270
      %p284 = scmp.eq.s32.totalorder %s26, 1
      %p285 = por %p283, %p284
      %p287 = scmp.ne.s32.totalorder %s270, %s286
      %p288 = scmp.eq.s32.totalorder %s26, 0
      %p289 = por %p287, %p288
      %p290 = scmp.le.s32.totalorder 1, %s20
      %p291 = scmp.lt.s32.totalorder %s20, 3
      %p292 = pnand %p290, %p291
      %p293 = pneg %p292
      // Predicated region
      $region9: #{tpu_custom_call.1} parent=5 // pred_check
        _
      $region10: #{tpu_custom_call.1} parent=5 // pred_check_branch
        %295 = sbr.rel (%p292) target = $region12
      $region11: #{tpu_custom_call.1} parent=5 // pred_region
        %s296 = ssub.s32 %s20, 1
        // Predicated region
        $region13: #{tpu_custom_call.1} parent=11 // pred_check
          %p297 = pneg %p67
        $region14: #{tpu_custom_call.1} parent=11 // pred_check_branch
          %299 = sbr.rel (%p297) target = $region16
        $region15: #{tpu_custom_call.1} parent=11 // pred_region
          _
        $region16: #{tpu_custom_call.1} parent=11 // pred_fallthru
          _
        // Predicated region
        $region17: #{tpu_custom_call.1} parent=11 // pred_check
          %p300 = pneg %p88
        $region18: #{tpu_custom_call.1} parent=11 // pred_check_branch
          %302 = sbr.rel (%p300) target = $region20
        $region19: #{tpu_custom_call.1} parent=11 // pred_region
          _
        $region20: #{tpu_custom_call.1} parent=11 // pred_fallthru
          _
        // Predicated region
        $region21: #{tpu_custom_call.1} parent=11 // pred_check
          %p303 = pneg %p109
        $region22: #{tpu_custom_call.1} parent=11 // pred_check_branch
          %305 = sbr.rel (%p303) target = $region24
        $region23: #{tpu_custom_call.1} parent=11 // pred_region
          _
        $region24: #{tpu_custom_call.1} parent=11 // pred_fallthru
          _
        // Predicated region
        $region25: #{tpu_custom_call.1} parent=11 // pred_check
          %p306 = pneg %p130
        $region26: #{tpu_custom_call.1} parent=11 // pred_check_branch
          %308 = sbr.rel (%p306) target = $region28
        $region27: #{tpu_custom_call.1} parent=11 // pred_region
          _
        $region28: #{tpu_custom_call.1} parent=11 // pred_fallthru
          _
        // Predicated region
        $region29: #{tpu_custom_call.1} parent=11 // pred_check
          %p309 = pneg %p151
        $region30: #{tpu_custom_call.1} parent=11 // pred_check_branch
          %311 = sbr.rel (%p309) target = $region32
        $region31: #{tpu_custom_call.1} parent=11 // pred_region
          _
        $region32: #{tpu_custom_call.1} parent=11 // pred_fallthru
          _
        // Predicated region
        $region33: #{tpu_custom_call.1} parent=11 // pred_check
          %p312 = pneg %p172
        $region34: #{tpu_custom_call.1} parent=11 // pred_check_branch
          %314 = sbr.rel (%p312) target = $region36
        $region35: #{tpu_custom_call.1} parent=11 // pred_region
          _
        $region36: #{tpu_custom_call.1} parent=11 // pred_fallthru
          _
        // Predicated region
        $region37: #{tpu_custom_call.1} parent=11 // pred_check
          %p315 = pneg %p193
        $region38: #{tpu_custom_call.1} parent=11 // pred_check_branch
          %317 = sbr.rel (%p315) target = $region40
        $region39: #{tpu_custom_call.1} parent=11 // pred_region
          _
        $region40: #{tpu_custom_call.1} parent=11 // pred_fallthru
          _
        // Predicated region
        $region41: #{tpu_custom_call.1} parent=11 // pred_check
          %p318 = pneg %p214
        $region42: #{tpu_custom_call.1} parent=11 // pred_check_branch
          %320 = sbr.rel (%p318) target = $region44
        $region43: #{tpu_custom_call.1} parent=11 // pred_region
          _
        $region44: #{tpu_custom_call.1} parent=11 // pred_fallthru
          _
        // Predicated region
        $region45: #{tpu_custom_call.1} parent=11 // pred_check
          %p321 = pneg %p235
        $region46: #{tpu_custom_call.1} parent=11 // pred_check_branch
          %323 = sbr.rel (%p321) target = $region48
        $region47: #{tpu_custom_call.1} parent=11 // pred_region
          _
        $region48: #{tpu_custom_call.1} parent=11 // pred_fallthru
          _
        // Predicated region
        $region49: #{tpu_custom_call.1} parent=11 // pred_check
          %p324 = pneg %p256
        $region50: #{tpu_custom_call.1} parent=11 // pred_check_branch
          %326 = sbr.rel (%p324) target = $region52
        $region51: #{tpu_custom_call.1} parent=11 // pred_region
          _
        $region52: #{tpu_custom_call.1} parent=11 // pred_fallthru
          _
      $region12: #{tpu_custom_call.1} parent=5 // pred_fallthru
        _
      %p327 = scmp.lt.s32.totalorder %s20, 2
      // Predicated region
      $region53: #{tpu_custom_call.1} parent=5 // pred_check
        %p328 = pneg %p327
      $region54: #{tpu_custom_call.1} parent=5 // pred_check_branch
        %330 = sbr.rel (%p328) target = $region56
      $region55: #{tpu_custom_call.1} parent=5 // pred_region
        // Predicated region
        $region57: #{tpu_custom_call.1} parent=55 // pred_check
          %p331 = pneg %p40
        $region58: #{tpu_custom_call.1} parent=55 // pred_check_branch
          %333 = sbr.rel (%p331) target = $region60
        $region59: #{tpu_custom_call.1} parent=55 // pred_region
          %p334 = scmp.lt.s32.totalorder %s20, 1
          %s335 = scalar_select %p334, %s20, 1
          %s336 = smul.addr %s335, 8
          %s337 = scalar_lea.vmem %s0, %s336
        $region60: #{tpu_custom_call.1} parent=55 // pred_fallthru
          _
      $region56: #{tpu_custom_call.1} parent=5 // pred_fallthru
        _
      %p338 = scmp.le.s32.totalorder 1, %s20
      %p339 = scmp.lt.s32.totalorder %s20, 3
      %p340 = pnand %p338, %p339
      %p341 = pneg %p340
      // Predicated region
      $region61: #{tpu_custom_call.1} parent=5 // pred_check
        _
      $region62: #{tpu_custom_call.1} parent=5 // pred_check_branch
        %343 = sbr.rel (%p340) target = $region64
      $region63: #{tpu_custom_call.1} parent=5 // pred_region
        %s344 = ssub.s32 %s20, 1
        %p345 = scmp.lt.s32.totalorder %s25, 1
        %s346 = scalar_select %p345, %s25, 1
        %s347 = smul.addr %s346, 8
        %s348 = scalar_lea.vmem %s0, %s347
        %p349 = pneg %p46
        %p350 = pneg %p43
        %p351 = pneg %p67
        %p352 = pneg %p64
        %p353 = pneg %p88
        %p354 = pneg %p85
        %p355 = pneg %p109
        %p356 = pneg %p106
        %p357 = pneg %p130
        %p358 = pneg %p127
        %p359 = pneg %p151
        %p360 = pneg %p148
        %p361 = pneg %p172
        %p362 = pneg %p169
        %p363 = pneg %p193
        %p364 = pneg %p190
        %p365 = pneg %p214
        %p366 = pneg %p211
        %p367 = pneg %p235
        %p368 = pneg %p232
        %p369 = pneg %p256
        %p370 = pneg %p253
        %p371 = pneg %p282
        %p372 = pneg %p279
        %s373 = sand.u32 %s269, 1
        %s374 = scalar_lea.sflag [#allocation3], %s373
        %s375 = sand.u32 %s269, 1
        %s376 = smul.addr %s375, 8
        %s377 = scalar_lea.vmem [#allocation2], %s376
        %p378 = scmp.lt.s32.totalorder %s25, 1
        %s379 = scalar_select %p378, %s25, 1
        %s380 = smul.addr %s379, 8
        %s381 = scalar_lea.vmem %s0, %s380
        %v383 = vld [vmem:[%s381] sm:$0xff]
        %v384 = vld [vmem:[%s1] sm:$0x1]
        %v385 = vld [vmem:[%s2] sm:$0x1]
        %vm386 = vcmask 261120
        %v387 = vsel %vm386, %v383, 0.0
        %388 = vadd.xlane.f32.xlu0 %v387
        %v389 = vpop.xlane.xlu0 %388
        %v390 = vrcp.pop 32.0
        %v391 = vmul.f32 %v389, %v390
        %v392 = vsub.f32 %v383, %v391
        %v393 = vmul.f32 %v392, %v392
        %v394 = vsel %vm386, %v393, 0.0
        %395 = vadd.xlane.f32.xlu0 %v394
        %v396 = vpop.xlane.xlu0 %395
        %v397 = vmul.f32 %v396, %v390
        %v398 = vadd.f32 %v397, 1e-05
        %v399 = vrsqrt.pop %v398
        %v400 = vmul.f32 %v392, %v399
        %v402 = vlaneseq
        %v403 = vshrl.u32 %v402, 7
        %v404 = vsub.s32 0, %v403
        %v405 = vrot.slane %v384, %v404
        %v407 = vmul.f32 %v400, %v405
        %v409 = vlaneseq
        %v410 = vshrl.u32 %v409, 7
        %v411 = vsub.s32 0, %v410
        %v412 = vrot.slane %v385, %v411
        %v414 = vadd.f32 %v407, %v412
        %v415 = vpack.c.bf16 %v414, %v414
        %v416 = vld [vmem:[%s3] sm:$0xff]
        %v417 = vld [vmem:[%s3 + $0x8] sm:$0xf]
        %v418 = vld [vmem:[%s3 + $0xc] sm:$0xff]
        %v419 = vld [vmem:[%s3 + $0x14] sm:$0xf]
        %v420 = vld [vmem:[%s3 + $0x18] sm:$0xff]
        %v421 = vld [vmem:[%s3 + $0x20] sm:$0xf]
        %v422 = vld [vmem:[%s3 + $0x24] sm:$0xff]
        %v423 = vld [vmem:[%s3 + $0x2c] sm:$0xf]
        %v432 = vunpack.c.l.b16 %v416
        %v433 = vunpack.c.h.b16 %v416
        %v434 = vunpack.c.l.b16 %v417
        %v435 = vunpack.c.l.b16 %v418
        %v436 = vunpack.c.h.b16 %v418
        %v437 = vunpack.c.l.b16 %v419
        %v438 = vunpack.c.l.b16 %v420
        %v439 = vunpack.c.h.b16 %v420
        %v440 = vunpack.c.l.b16 %v421
        %v441 = vunpack.c.l.b16 %v422
        %v442 = vunpack.c.h.b16 %v422
        %v443 = vunpack.c.l.b16 %v423
        %v444 = vpack.c.b16 %v435, %v432
        %v445 = vpack.c.b16 %v436, %v433
        %v446 = vpack.c.b16 %v437, %v434
        %v447 = vpack.c.b16 %v441, %v438
        %v448 = vpack.c.b16 %v442, %v439
        %v449 = vpack.c.b16 %v443, %v440
        %v457 = vsel %vm386, %v415, 0
        %459 = vmatprep.subr.bf16.mxu0 %v445
        %460 = vmatpush1.bf16.msra.mxu0 %v444
        %461 = vmatprep.subr.bf16.mxu0 %v448
        %462 = vmatpush1.bf16.msra.mxu0 %v447
        %463 = vmatprep.subr.bf16.mxu0 0
        %464 = vmatpush1.bf16.msra.mxu0 0
        %465 = vmatprep.subr.bf16.mxu0 0
        %466 = vmatpush1.bf16.msra.mxu0 0
        %467 = vmatprep.subr.bf16.mxu0 0
        %468 = vmatpush1.bf16.msra.mxu0 0
        %469 = vmatprep.subr.bf16.mxu0 0
        %470 = vmatpush1.bf16.msra.mxu0 0
        %471 = vmatprep.subr.bf16.mxu0 0
        %472 = vmatpush1.bf16.msra.mxu0 0
        %473 = vmatprep.subr.bf16.mxu0 0
        %474 = vmatpush1.bf16.msra.mxu0 0
        %475 = vmatprep.subr.bf16.mxu0 0
        %476 = vmatpush1.bf16.msra.mxu0 0
        %477 = vmatprep.subr.bf16.mxu0 0
        %478 = vmatpush1.bf16.msra.mxu0 0
        %479 = vmatprep.subr.bf16.mxu0 0
        %480 = vmatpush1.bf16.msra.mxu0 0
        %481 = vmatprep.subr.bf16.mxu0 0
        %482 = vmatpush1.bf16.msra.mxu0 0
        %483 = vmatprep.subr.bf16.mxu0 0
        %484 = vmatpush1.bf16.msra.mxu0 0
        %485 = vmatprep.subr.bf16.mxu0 0
        %486 = vmatpush1.bf16.msra.mxu0 0
        %487 = vmatprep.subr.bf16.mxu0 0
        %488 = vmatpush1.bf16.msra.mxu0 0
        %489 = vmatprep.subr.bf16.mxu0 0
        %490 = vmatpush1.bf16.msra.mxu0 0
        %491 = vmatprep.mubr.bf16.mxu0 0
        %492 = vmatmul.mubr.bf16.gmra.mrb[0].mxu0 %v457
        %v493 = vpop.f32.mrb[0].mxu0
        %v494 = vadd.f32 0.0, %v493
        %v495 = vpop.f32.mrb[0].mxu0
        %v496 = vadd.f32 0.0, %v495
        %v497 = vpop.f32.mrb[0].mxu0
        %v498 = vpop.f32.mrb[0].mxu0
        %499 = vdwg.mxu0
        %500 = vmatprep.subr.bf16.mxu0 0
        %501 = vmatpush1.bf16.msra.mxu0 %v446
        %502 = vmatprep.subr.bf16.mxu0 0
        %503 = vmatpush1.bf16.msra.mxu0 %v449
        %504 = vmatprep.subr.bf16.mxu0 0
        %505 = vmatpush1.bf16.msra.mxu0 0
        %506 = vmatprep.subr.bf16.mxu0 0
        %507 = vmatpush1.bf16.msra.mxu0 0
        %508 = vmatprep.subr.bf16.mxu0 0
        %509 = vmatpush1.bf16.msra.mxu0 0
        %510 = vmatprep.subr.bf16.mxu0 0
        %511 = vmatpush1.bf16.msra.mxu0 0
        %512 = vmatprep.subr.bf16.mxu0 0
        %513 = vmatpush1.bf16.msra.mxu0 0
        %514 = vmatprep.subr.bf16.mxu0 0
        %515 = vmatpush1.bf16.msra.mxu0 0
        %516 = vmatprep.subr.bf16.mxu0 0
        %517 = vmatpush1.bf16.msra.mxu0 0
        %518 = vmatprep.subr.bf16.mxu0 0
        %519 = vmatpush1.bf16.msra.mxu0 0
        %520 = vmatprep.subr.bf16.mxu0 0
        %521 = vmatpush1.bf16.msra.mxu0 0
        %522 = vmatprep.subr.bf16.mxu0 0
        %523 = vmatpush1.bf16.msra.mxu0 0
        %524 = vmatprep.subr.bf16.mxu0 0
        %525 = vmatpush1.bf16.msra.mxu0 0
        %526 = vmatprep.subr.bf16.mxu0 0
        %527 = vmatpush1.bf16.msra.mxu0 0
        %528 = vmatprep.subr.bf16.mxu0 0
        %529 = vmatpush1.bf16.msra.mxu0 0
        %530 = vmatprep.subr.bf16.mxu0 0
        %531 = vmatpush1.bf16.msra.mxu0 0
        %532 = vmatprep.mubr.bf16.mxu0 0
        %533 = vmatmul.mubr.bf16.gmra.mrb[0].mxu0 %v457
        %v534 = vpop.f32.mrb[0].mxu0
        %v535 = vadd.f32 0.0, %v534
        %v536 = vpop.f32.mrb[0].mxu0
        %v537 = vpop.f32.mrb[0].mxu0
        %v538 = vpop.f32.mrb[0].mxu0
        %539 = vdwg.mxu0
        %v540 = vpack.c.bf16 %v494, %v494
        %v541 = vpack.c.bf16 %v496, %v496
        %v542 = vpack.c.bf16 %v535, %v535
        %v543 = vlaneseq
        %v544 = vshrl.u32 %v543, 7
        %v545 = vlaneseq
        %v546 = vand.u32 %v545, 127
        %vm547 = vcmp.ge.s32.totalorder %v544, %v546
        %v548 = vsel %vm547, 0.0, -1e+30
        %550 = vrot.lane.b32.xlu0 %v540, 80
        %v551 = vpop.permute.xlu0 %550
        %vm552 = vcmask 64512
        %v554 = vsel %vm552, %v540, 0
        %v557 = vsel %vm552, %v551, 0
        %559 = vmatprep.subr.bf16.mxu0 0
        %560 = vmatpush1.bf16.xpose.msra.mxu0 %v557
        %561 = vmatprep.subr.bf16.mxu0 0
        %562 = vmatpush1.bf16.xpose.msra.mxu0 0
        %563 = vmatprep.subr.bf16.mxu0 0
        %564 = vmatpush1.bf16.xpose.msra.mxu0 0
        %565 = vmatprep.subr.bf16.mxu0 0
        %566 = vmatpush1.bf16.xpose.msra.mxu0 0
        %567 = vmatprep.subr.bf16.mxu0 0
        %568 = vmatpush1.bf16.xpose.msra.mxu0 0
        %569 = vmatprep.subr.bf16.mxu0 0
        %570 = vmatpush1.bf16.xpose.msra.mxu0 0
        %571 = vmatprep.subr.bf16.mxu0 0
        %572 = vmatpush1.bf16.xpose.msra.mxu0 0
        %573 = vmatprep.subr.bf16.mxu0 0
        %574 = vmatpush1.bf16.xpose.msra.mxu0 0
        %575 = vmatprep.subr.bf16.mxu0 0
        %576 = vmatpush1.bf16.xpose.msra.mxu0 0
        %577 = vmatprep.subr.bf16.mxu0 0
        %578 = vmatpush1.bf16.xpose.msra.mxu0 0
        %579 = vmatprep.subr.bf16.mxu0 0
        %580 = vmatpush1.bf16.xpose.msra.mxu0 0
        %581 = vmatprep.subr.bf16.mxu0 0
        %582 = vmatpush1.bf16.xpose.msra.mxu0 0
        %583 = vmatprep.subr.bf16.mxu0 0
        %584 = vmatpush1.bf16.xpose.msra.mxu0 0
        %585 = vmatprep.subr.bf16.mxu0 0
        %586 = vmatpush1.bf16.xpose.msra.mxu0 0
        %587 = vmatprep.subr.bf16.mxu0 0
        %588 = vmatpush1.bf16.xpose.msra.mxu0 0
        %589 = vmatprep.subr.bf16.mxu0 0
        %590 = vmatpush1.bf16.xpose.msra.mxu0 0
        %591 = vmatprep.mubr.bf16.mxu0 0
        %592 = vmatmul.mubr.bf16.gmra.mrb[0].mxu0 %v554
        %v593 = vpop.f32.mrb[0].mxu0
        %v594 = vadd.f32 %v548, %v593
        %v595 = vpop.f32.mrb[0].mxu0
        %v596 = vpop.f32.mrb[0].mxu0
        %v597 = vpop.f32.mrb[0].mxu0
        %598 = vdwg.mxu0
        %v599 = vsel %vm552, %v594, -inf
        %600 = vmax.xlane.f32.xlu0 %v599
        %v601 = vpop.xlane.xlu0 %600
        %v602 = vsub.f32 %v594, %v601
        %v603 = vmul.f32 %v602, 1.442695
        %v604 = vpow.pop %v603
        %v605 = vsel %vm552, %v604, 0.0
        %606 = vadd.xlane.f32.xlu0 %v605
        %v607 = vpop.xlane.xlu0 %606
        %v608 = vpack.c.bf16 %v604, %v604
        %609 = vrot.lane.b32.xlu0 %v540, 32
        %v610 = vpop.permute.xlu0 %609
        %v612 = vsel %vm552, %v608, 0
        %vm614 = vcmask 1043456
        %v616 = vsel %vm614, %v610, 0
        %618 = vmatprep.subr.bf16.mxu0 0
        %619 = vmatpush1.bf16.msra.mxu0 %v616
        %620 = vmatprep.subr.bf16.mxu0 0
        %621 = vmatpush1.bf16.msra.mxu0 0
        %622 = vmatprep.subr.bf16.mxu0 0
        %623 = vmatpush1.bf16.msra.mxu0 0
        %624 = vmatprep.subr.bf16.mxu0 0
        %625 = vmatpush1.bf16.msra.mxu0 0
        %626 = vmatprep.subr.bf16.mxu0 0
        %627 = vmatpush1.bf16.msra.mxu0 0
        %628 = vmatprep.subr.bf16.mxu0 0
        %629 = vmatpush1.bf16.msra.mxu0 0
        %630 = vmatprep.subr.bf16.mxu0 0
        %631 = vmatpush1.bf16.msra.mxu0 0
        %632 = vmatprep.subr.bf16.mxu0 0
        %633 = vmatpush1.bf16.msra.mxu0 0
        %634 = vmatprep.subr.bf16.mxu0 0
        %635 = vmatpush1.bf16.msra.mxu0 0
        %636 = vmatprep.subr.bf16.mxu0 0
        %637 = vmatpush1.bf16.msra.mxu0 0
        %638 = vmatprep.subr.bf16.mxu0 0
        %639 = vmatpush1.bf16.msra.mxu0 0
        %640 = vmatprep.subr.bf16.mxu0 0
        %641 = vmatpush1.bf16.msra.mxu0 0
        %642 = vmatprep.subr.bf16.mxu0 0
        %643 = vmatpush1.bf16.msra.mxu0 0
        %644 = vmatprep.subr.bf16.mxu0 0
        %645 = vmatpush1.bf16.msra.mxu0 0
        %646 = vmatprep.subr.bf16.mxu0 0
        %647 = vmatpush1.bf16.msra.mxu0 0
        %648 = vmatprep.subr.bf16.mxu0 0
        %649 = vmatpush1.bf16.msra.mxu0 0
        %650 = vmatprep.mubr.bf16.mxu0 0
        %651 = vmatmul.mubr.bf16.gmra.mrb[0].mxu0 %v612
        %v652 = vpop.f32.mrb[0].mxu0
        %v653 = vadd.f32 0.0, %v652
        %v654 = vpop.f32.mrb[0].mxu0
        %v655 = vpop.f32.mrb[0].mxu0
        %v656 = vpop.f32.mrb[0].mxu0
        %657 = vdwg.mxu0
        %v658 = vrcp.pop %v607
        %v659 = vmul.f32 %v653, %v658
        %v660 = vadd.f32 %v659, 0.0
        %661 = vrot.lane.b32.xlu0 %v540, 120
        %v662 = vpop.permute.xlu0 %661
        %663 = vrot.lane.b32.xlu0 %v540, 72
        %v664 = vpop.permute.xlu0 %663
        %v666 = vsel %vm552, %v662, 0
        %v669 = vsel %vm552, %v664, 0
        %671 = vmatprep.subr.bf16.mxu0 0
        %672 = vmatpush1.bf16.xpose.msra.mxu0 %v669
        %673 = vmatprep.subr.bf16.mxu0 0
        %674 = vmatpush1.bf16.xpose.msra.mxu0 0
        %675 = vmatprep.subr.bf16.mxu0 0
        %676 = vmatpush1.bf16.xpose.msra.mxu0 0
        %677 = vmatprep.subr.bf16.mxu0 0
        %678 = vmatpush1.bf16.xpose.msra.mxu0 0
        %679 = vmatprep.subr.bf16.mxu0 0
        %680 = vmatpush1.bf16.xpose.msra.mxu0 0
        %681 = vmatprep.subr.bf16.mxu0 0
        %682 = vmatpush1.bf16.xpose.msra.mxu0 0
        %683 = vmatprep.subr.bf16.mxu0 0
        %684 = vmatpush1.bf16.xpose.msra.mxu0 0
        %685 = vmatprep.subr.bf16.mxu0 0
        %686 = vmatpush1.bf16.xpose.msra.mxu0 0
        %687 = vmatprep.subr.bf16.mxu0 0
        %688 = vmatpush1.bf16.xpose.msra.mxu0 0
        %689 = vmatprep.subr.bf16.mxu0 0
        %690 = vmatpush1.bf16.xpose.msra.mxu0 0
        %691 = vmatprep.subr.bf16.mxu0 0
        %692 = vmatpush1.bf16.xpose.msra.mxu0 0
        %693 = vmatprep.subr.bf16.mxu0 0
        %694 = vmatpush1.bf16.xpose.msra.mxu0 0
        %695 = vmatprep.subr.bf16.mxu0 0
        %696 = vmatpush1.bf16.xpose.msra.mxu0 0
        %697 = vmatprep.subr.bf16.mxu0 0
        %698 = vmatpush1.bf16.xpose.msra.mxu0 0
        %699 = vmatprep.subr.bf16.mxu0 0
        %700 = vmatpush1.bf16.xpose.msra.mxu0 0
        %701 = vmatprep.subr.bf16.mxu0 0
        %702 = vmatpush1.bf16.xpose.msra.mxu0 0
        %703 = vmatprep.mubr.bf16.mxu0 0
        %704 = vmatmul.mubr.bf16.gmra.mrb[0].mxu0 %v666
        %v705 = vpop.f32.mrb[0].mxu0
        %v706 = vadd.f32 %v548, %v705
        %v707 = vpop.f32.mrb[0].mxu0
        %v708 = vpop.f32.mrb[0].mxu0
        %v709 = vpop.f32.mrb[0].mxu0
        %710 = vdwg.mxu0
        %v711 = vsel %vm552, %v706, -inf
        %712 = vmax.xlane.f32.xlu0 %v711
        %v713 = vpop.xlane.xlu0 %712
        %v714 = vsub.f32 %v706, %v713
        %v715 = vmul.f32 %v714, 1.442695
        %v716 = vpow.pop %v715
        %v717 = vsel %vm552, %v716, 0.0
        %718 = vadd.xlane.f32.xlu0 %v717
        %v719 = vpop.xlane.xlu0 %718
        %v720 = vpack.c.bf16 %v716, %v716
        %v722 = vsel %vm552, %v720, 0
        %v725 = vsel %vm614, %v541, 0
        %727 = vmatprep.subr.bf16.mxu0 0
        %728 = vmatpush1.bf16.msra.mxu0 %v725
        %729 = vmatprep.subr.bf16.mxu0 0
        %730 = vmatpush1.bf16.msra.mxu0 0
        %731 = vmatprep.subr.bf16.mxu0 0
        %732 = vmatpush1.bf16.msra.mxu0 0
        %733 = vmatprep.subr.bf16.mxu0 0
        %734 = vmatpush1.bf16.msra.mxu0 0
        %735 = vmatprep.subr.bf16.mxu0 0
        %736 = vmatpush1.bf16.msra.mxu0 0
        %737 = vmatprep.subr.bf16.mxu0 0
        %738 = vmatpush1.bf16.msra.mxu0 0
        %739 = vmatprep.subr.bf16.mxu0 0
        %740 = vmatpush1.bf16.msra.mxu0 0
        %741 = vmatprep.subr.bf16.mxu0 0
        %742 = vmatpush1.bf16.msra.mxu0 0
        %743 = vmatprep.subr.bf16.mxu0 0
        %744 = vmatpush1.bf16.msra.mxu0 0
        %745 = vmatprep.subr.bf16.mxu0 0
        %746 = vmatpush1.bf16.msra.mxu0 0
        %747 = vmatprep.subr.bf16.mxu0 0
        %748 = vmatpush1.bf16.msra.mxu0 0
        %749 = vmatprep.subr.bf16.mxu0 0
        %750 = vmatpush1.bf16.msra.mxu0 0
        %751 = vmatprep.subr.bf16.mxu0 0
        %752 = vmatpush1.bf16.msra.mxu0 0
        %753 = vmatprep.subr.bf16.mxu0 0
        %754 = vmatpush1.bf16.msra.mxu0 0
        %755 = vmatprep.subr.bf16.mxu0 0
        %756 = vmatpush1.bf16.msra.mxu0 0
        %757 = vmatprep.subr.bf16.mxu0 0
        %758 = vmatpush1.bf16.msra.mxu0 0
        %759 = vmatprep.mubr.bf16.mxu0 0
        %760 = vmatmul.mubr.bf16.gmra.mrb[0].mxu0 %v722
        %v761 = vpop.f32.mrb[0].mxu0
        %v762 = vadd.f32 0.0, %v761
        %v763 = vpop.f32.mrb[0].mxu0
        %v764 = vpop.f32.mrb[0].mxu0
        %v765 = vpop.f32.mrb[0].mxu0
        %766 = vdwg.mxu0
        %v767 = vrcp.pop %v719
        %v768 = vmul.f32 %v762, %v767
        %v769 = vadd.f32 %v660, %v768
        %770 = vrot.lane.b32.xlu0 %v540, 112
        %v771 = vpop.permute.xlu0 %770
        %772 = vrot.lane.b32.xlu0 %v540, 64
        %v773 = vpop.permute.xlu0 %772
        %v775 = vsel %vm552, %v771, 0
        %v778 = vsel %vm552, %v773, 0
        %780 = vmatprep.subr.bf16.mxu0 0
        %781 = vmatpush1.bf16.xpose.msra.mxu0 %v778
        %782 = vmatprep.subr.bf16.mxu0 0
        %783 = vmatpush1.bf16.xpose.msra.mxu0 0
        %784 = vmatprep.subr.bf16.mxu0 0
        %785 = vmatpush1.bf16.xpose.msra.mxu0 0
        %786 = vmatprep.subr.bf16.mxu0 0
        %787 = vmatpush1.bf16.xpose.msra.mxu0 0
        %788 = vmatprep.subr.bf16.mxu0 0
        %789 = vmatpush1.bf16.xpose.msra.mxu0 0
        %790 = vmatprep.subr.bf16.mxu0 0
        %791 = vmatpush1.bf16.xpose.msra.mxu0 0
        %792 = vmatprep.subr.bf16.mxu0 0
        %793 = vmatpush1.bf16.xpose.msra.mxu0 0
        %794 = vmatprep.subr.bf16.mxu0 0
        %795 = vmatpush1.bf16.xpose.msra.mxu0 0
        %796 = vmatprep.subr.bf16.mxu0 0
        %797 = vmatpush1.bf16.xpose.msra.mxu0 0
        %798 = vmatprep.subr.bf16.mxu0 0
        %799 = vmatpush1.bf16.xpose.msra.mxu0 0
        %800 = vmatprep.subr.bf16.mxu0 0
        %801 = vmatpush1.bf16.xpose.msra.mxu0 0
        %802 = vmatprep.subr.bf16.mxu0 0
        %803 = vmatpush1.bf16.xpose.msra.mxu0 0
        %804 = vmatprep.subr.bf16.mxu0 0
        %805 = vmatpush1.bf16.xpose.msra.mxu0 0
        %806 = vmatprep.subr.bf16.mxu0 0
        %807 = vmatpush1.bf16.xpose.msra.mxu0 0
        %808 = vmatprep.subr.bf16.mxu0 0
        %809 = vmatpush1.bf16.xpose.msra.mxu0 0
        %810 = vmatprep.subr.bf16.mxu0 0
        %811 = vmatpush1.bf16.xpose.msra.mxu0 0
        %812 = vmatprep.mubr.bf16.mxu0 0
        %813 = vmatmul.mubr.bf16.gmra.mrb[0].mxu0 %v775
        %v814 = vpop.f32.mrb[0].mxu0
        %v815 = vadd.f32 %v548, %v814
        %v816 = vpop.f32.mrb[0].mxu0
        %v817 = vpop.f32.mrb[0].mxu0
        %v818 = vpop.f32.mrb[0].mxu0
        %819 = vdwg.mxu0
        %v820 = vsel %vm552, %v815, -inf
        %821 = vmax.xlane.f32.xlu0 %v820
        %v822 = vpop.xlane.xlu0 %821
        %v823 = vsub.f32 %v815, %v822
        %v824 = vmul.f32 %v823, 1.442695
        %v825 = vpow.pop %v824
        %v826 = vsel %vm552, %v825, 0.0
        %827 = vadd.xlane.f32.xlu0 %v826
        %v828 = vpop.xlane.xlu0 %827
        %v829 = vpack.c.bf16 %v825, %v825
        %831 = vrot.lane.b32.xlu0 %v541, 96
        %v832 = vpop.permute.xlu0 %831
        %v834 = vsel %vm552, %v829, 0
        %v837 = vsel %vm614, %v832, 0
        %839 = vmatprep.subr.bf16.mxu0 0
        %840 = vmatpush1.bf16.msra.mxu0 %v837
        %841 = vmatprep.subr.bf16.mxu0 0
        %842 = vmatpush1.bf16.msra.mxu0 0
        %843 = vmatprep.subr.bf16.mxu0 0
        %844 = vmatpush1.bf16.msra.mxu0 0
        %845 = vmatprep.subr.bf16.mxu0 0
        %846 = vmatpush1.bf16.msra.mxu0 0
        %847 = vmatprep.subr.bf16.mxu0 0
        %848 = vmatpush1.bf16.msra.mxu0 0
        %849 = vmatprep.subr.bf16.mxu0 0
        %850 = vmatpush1.bf16.msra.mxu0 0
        %851 = vmatprep.subr.bf16.mxu0 0
        %852 = vmatpush1.bf16.msra.mxu0 0
        %853 = vmatprep.subr.bf16.mxu0 0
        %854 = vmatpush1.bf16.msra.mxu0 0
        %855 = vmatprep.subr.bf16.mxu0 0
        %856 = vmatpush1.bf16.msra.mxu0 0
        %857 = vmatprep.subr.bf16.mxu0 0
        %858 = vmatpush1.bf16.msra.mxu0 0
        %859 = vmatprep.subr.bf16.mxu0 0
        %860 = vmatpush1.bf16.msra.mxu0 0
        %861 = vmatprep.subr.bf16.mxu0 0
        %862 = vmatpush1.bf16.msra.mxu0 0
        %863 = vmatprep.subr.bf16.mxu0 0
        %864 = vmatpush1.bf16.msra.mxu0 0
        %865 = vmatprep.subr.bf16.mxu0 0
        %866 = vmatpush1.bf16.msra.mxu0 0
        %867 = vmatprep.subr.bf16.mxu0 0
        %868 = vmatpush1.bf16.msra.mxu0 0
        %869 = vmatprep.subr.bf16.mxu0 0
        %870 = vmatpush1.bf16.msra.mxu0 0
        %871 = vmatprep.mubr.bf16.mxu0 0
        %872 = vmatmul.mubr.bf16.gmra.mrb[0].mxu0 %v834
        %v873 = vpop.f32.mrb[0].mxu0
        %v874 = vadd.f32 0.0, %v873
        %v875 = vpop.f32.mrb[0].mxu0
        %v876 = vpop.f32.mrb[0].mxu0
        %v877 = vpop.f32.mrb[0].mxu0
        %878 = vdwg.mxu0
        %v879 = vrcp.pop %v828
        %v880 = vmul.f32 %v874, %v879
        %v881 = vadd.f32 %v769, %v880
        %882 = vrot.lane.b32.xlu0 %v540, 104
        %v883 = vpop.permute.xlu0 %882
        %884 = vrot.lane.b32.xlu0 %v540, 56
        %v885 = vpop.permute.xlu0 %884
        %v887 = vsel %vm552, %v883, 0
        %v890 = vsel %vm552, %v885, 0
        %892 = vmatprep.subr.bf16.mxu0 0
        %893 = vmatpush1.bf16.xpose.msra.mxu0 %v890
        %894 = vmatprep.subr.bf16.mxu0 0
        %895 = vmatpush1.bf16.xpose.msra.mxu0 0
        %896 = vmatprep.subr.bf16.mxu0 0
        %897 = vmatpush1.bf16.xpose.msra.mxu0 0
        %898 = vmatprep.subr.bf16.mxu0 0
        %899 = vmatpush1.bf16.xpose.msra.mxu0 0
        %900 = vmatprep.subr.bf16.mxu0 0
        %901 = vmatpush1.bf16.xpose.msra.mxu0 0
        %902 = vmatprep.subr.bf16.mxu0 0
        %903 = vmatpush1.bf16.xpose.msra.mxu0 0
        %904 = vmatprep.subr.bf16.mxu0 0
        %905 = vmatpush1.bf16.xpose.msra.mxu0 0
        %906 = vmatprep.subr.bf16.mxu0 0
        %907 = vmatpush1.bf16.xpose.msra.mxu0 0
        %908 = vmatprep.subr.bf16.mxu0 0
        %909 = vmatpush1.bf16.xpose.msra.mxu0 0
        %910 = vmatprep.subr.bf16.mxu0 0
        %911 = vmatpush1.bf16.xpose.msra.mxu0 0
        %912 = vmatprep.subr.bf16.mxu0 0
        %913 = vmatpush1.bf16.xpose.msra.mxu0 0
        %914 = vmatprep.subr.bf16.mxu0 0
        %915 = vmatpush1.bf16.xpose.msra.mxu0 0
        %916 = vmatprep.subr.bf16.mxu0 0
        %917 = vmatpush1.bf16.xpose.msra.mxu0 0
        %918 = vmatprep.subr.bf16.mxu0 0
        %919 = vmatpush1.bf16.xpose.msra.mxu0 0
        %920 = vmatprep.subr.bf16.mxu0 0
        %921 = vmatpush1.bf16.xpose.msra.mxu0 0
        %922 = vmatprep.subr.bf16.mxu0 0
        %923 = vmatpush1.bf16.xpose.msra.mxu0 0
        %924 = vmatprep.mubr.bf16.mxu0 0
        %925 = vmatmul.mubr.bf16.gmra.mrb[0].mxu0 %v887
        %v926 = vpop.f32.mrb[0].mxu0
        %v927 = vadd.f32 %v548, %v926
        %v928 = vpop.f32.mrb[0].mxu0
        %v929 = vpop.f32.mrb[0].mxu0
        %v930 = vpop.f32.mrb[0].mxu0
        %931 = vdwg.mxu0
        %v932 = vsel %vm552, %v927, -inf
        %933 = vmax.xlane.f32.xlu0 %v932
        %v934 = vpop.xlane.xlu0 %933
        %v935 = vsub.f32 %v927, %v934
        %v936 = vmul.f32 %v935, 1.442695
        %v937 = vpow.pop %v936
        %v938 = vsel %vm552, %v937, 0.0
        %939 = vadd.xlane.f32.xlu0 %v938
        %v940 = vpop.xlane.xlu0 %939
        %v941 = vpack.c.bf16 %v937, %v937
        %942 = vrot.lane.b32.xlu0 %v541, 64
        %v943 = vpop.permute.xlu0 %942
        %v945 = vsel %vm552, %v941, 0
        %v948 = vsel %vm614, %v943, 0
        %950 = vmatprep.subr.bf16.mxu0 0
        %951 = vmatpush1.bf16.msra.mxu0 %v948
        %952 = vmatprep.subr.bf16.mxu0 0
        %953 = vmatpush1.bf16.msra.mxu0 0
        %954 = vmatprep.subr.bf16.mxu0 0
        %955 = vmatpush1.bf16.msra.mxu0 0
        %956 = vmatprep.subr.bf16.mxu0 0
        %957 = vmatpush1.bf16.msra.mxu0 0
        %958 = vmatprep.subr.bf16.mxu0 0
        %959 = vmatpush1.bf16.msra.mxu0 0
        %960 = vmatprep.subr.bf16.mxu0 0
        %961 = vmatpush1.bf16.msra.mxu0 0
        %962 = vmatprep.subr.bf16.mxu0 0
        %963 = vmatpush1.bf16.msra.mxu0 0
        %964 = vmatprep.subr.bf16.mxu0 0
        %965 = vmatpush1.bf16.msra.mxu0 0
        %966 = vmatprep.subr.bf16.mxu0 0
        %967 = vmatpush1.bf16.msra.mxu0 0
        %968 = vmatprep.subr.bf16.mxu0 0
        %969 = vmatpush1.bf16.msra.mxu0 0
        %970 = vmatprep.subr.bf16.mxu0 0
        %971 = vmatpush1.bf16.msra.mxu0 0
        %972 = vmatprep.subr.bf16.mxu0 0
        %973 = vmatpush1.bf16.msra.mxu0 0
        %974 = vmatprep.subr.bf16.mxu0 0
        %975 = vmatpush1.bf16.msra.mxu0 0
        %976 = vmatprep.subr.bf16.mxu0 0
        %977 = vmatpush1.bf16.msra.mxu0 0
        %978 = vmatprep.subr.bf16.mxu0 0
        %979 = vmatpush1.bf16.msra.mxu0 0
        %980 = vmatprep.subr.bf16.mxu0 0
        %981 = vmatpush1.bf16.msra.mxu0 0
        %982 = vmatprep.mubr.bf16.mxu0 0
        %983 = vmatmul.mubr.bf16.gmra.mrb[0].mxu0 %v945
        %v984 = vpop.f32.mrb[0].mxu0
        %v985 = vadd.f32 0.0, %v984
        %v986 = vpop.f32.mrb[0].mxu0
        %v987 = vpop.f32.mrb[0].mxu0
        %v988 = vpop.f32.mrb[0].mxu0
        %989 = vdwg.mxu0
        %v990 = vrcp.pop %v940
        %v991 = vmul.f32 %v985, %v990
        %v992 = vadd.f32 %v881, %v991
        %993 = vrot.lane.b32.xlu0 %v540, 96
        %v994 = vpop.permute.xlu0 %993
        %995 = vrot.lane.b32.xlu0 %v540, 48
        %v996 = vpop.permute.xlu0 %995
        %v998 = vsel %vm552, %v994, 0
        %v1001 = vsel %vm552, %v996, 0
        %1003 = vmatprep.subr.bf16.mxu0 0
        %1004 = vmatpush1.bf16.xpose.msra.mxu0 %v1001
        %1005 = vmatprep.subr.bf16.mxu0 0
        %1006 = vmatpush1.bf16.xpose.msra.mxu0 0
        %1007 = vmatprep.subr.bf16.mxu0 0
        %1008 = vmatpush1.bf16.xpose.msra.mxu0 0
        %1009 = vmatprep.subr.bf16.mxu0 0
        %1010 = vmatpush1.bf16.xpose.msra.mxu0 0
        %1011 = vmatprep.subr.bf16.mxu0 0
        %1012 = vmatpush1.bf16.xpose.msra.mxu0 0
        %1013 = vmatprep.subr.bf16.mxu0 0
        %1014 = vmatpush1.bf16.xpose.msra.mxu0 0
        %1015 = vmatprep.subr.bf16.mxu0 0
        %1016 = vmatpush1.bf16.xpose.msra.mxu0 0
        %1017 = vmatprep.subr.bf16.mxu0 0
        %1018 = vmatpush1.bf16.xpose.msra.mxu0 0
        %1019 = vmatprep.subr.bf16.mxu0 0
        %1020 = vmatpush1.bf16.xpose.msra.mxu0 0
        %1021 = vmatprep.subr.bf16.mxu0 0
        %1022 = vmatpush1.bf16.xpose.msra.mxu0 0
        %1023 = vmatprep.subr.bf16.mxu0 0
        %1024 = vmatpush1.bf16.xpose.msra.mxu0 0
        %1025 = vmatprep.subr.bf16.mxu0 0
        %1026 = vmatpush1.bf16.xpose.msra.mxu0 0
        %1027 = vmatprep.subr.bf16.mxu0 0
        %1028 = vmatpush1.bf16.xpose.msra.mxu0 0
        %1029 = vmatprep.subr.bf16.mxu0 0
        %1030 = vmatpush1.bf16.xpose.msra.mxu0 0
        %1031 = vmatprep.subr.bf16.mxu0 0
        %1032 = vmatpush1.bf16.xpose.msra.mxu0 0
        %1033 = vmatprep.subr.bf16.mxu0 0
        %1034 = vmatpush1.bf16.xpose.msra.mxu0 0
        %1035 = vmatprep.mubr.bf16.mxu0 0
        %1036 = vmatmul.mubr.bf16.gmra.mrb[0].mxu0 %v998
        %v1037 = vpop.f32.mrb[0].mxu0
        %v1038 = vadd.f32 %v548, %v1037
        %v1039 = vpop.f32.mrb[0].mxu0
        %v1040 = vpop.f32.mrb[0].mxu0
        %v1041 = vpop.f32.mrb[0].mxu0
        %1042 = vdwg.mxu0
        %v1043 = vsel %vm552, %v1038, -inf
        %1044 = vmax.xlane.f32.xlu0 %v1043
        %v1045 = vpop.xlane.xlu0 %1044
        %v1046 = vsub.f32 %v1038, %v1045
        %v1047 = vmul.f32 %v1046, 1.442695
        %v1048 = vpow.pop %v1047
        %v1049 = vsel %vm552, %v1048, 0.0
        %1050 = vadd.xlane.f32.xlu0 %v1049
        %v1051 = vpop.xlane.xlu0 %1050
        %v1052 = vpack.c.bf16 %v1048, %v1048
        %1053 = vrot.lane.b32.xlu0 %v541, 32
        %v1054 = vpop.permute.xlu0 %1053
        %v1056 = vsel %vm552, %v1052, 0
        %v1059 = vsel %vm614, %v1054, 0
        %1061 = vmatprep.subr.bf16.mxu0 0
        %1062 = vmatpush1.bf16.msra.mxu0 %v1059
        %1063 = vmatprep.subr.bf16.mxu0 0
        %1064 = vmatpush1.bf16.msra.mxu0 0
        %1065 = vmatprep.subr.bf16.mxu0 0
        %1066 = vmatpush1.bf16.msra.mxu0 0
        %1067 = vmatprep.subr.bf16.mxu0 0
        %1068 = vmatpush1.bf16.msra.mxu0 0
        %1069 = vmatprep.subr.bf16.mxu0 0
        %1070 = vmatpush1.bf16.msra.mxu0 0
        %1071 = vmatprep.subr.bf16.mxu0 0
        %1072 = vmatpush1.bf16.msra.mxu0 0
        %1073 = vmatprep.subr.bf16.mxu0 0
        %1074 = vmatpush1.bf16.msra.mxu0 0
        %1075 = vmatprep.subr.bf16.mxu0 0
        %1076 = vmatpush1.bf16.msra.mxu0 0
        %1077 = vmatprep.subr.bf16.mxu0 0
        %1078 = vmatpush1.bf16.msra.mxu0 0
        %1079 = vmatprep.subr.bf16.mxu0 0
        %1080 = vmatpush1.bf16.msra.mxu0 0
        %1081 = vmatprep.subr.bf16.mxu0 0
        %1082 = vmatpush1.bf16.msra.mxu0 0
        %1083 = vmatprep.subr.bf16.mxu0 0
        %1084 = vmatpush1.bf16.msra.mxu0 0
        %1085 = vmatprep.subr.bf16.mxu0 0
        %1086 = vmatpush1.bf16.msra.mxu0 0
        %1087 = vmatprep.subr.bf16.mxu0 0
        %1088 = vmatpush1.bf16.msra.mxu0 0
        %1089 = vmatprep.subr.bf16.mxu0 0
        %1090 = vmatpush1.bf16.msra.mxu0 0
        %1091 = vmatprep.subr.bf16.mxu0 0
        %1092 = vmatpush1.bf16.msra.mxu0 0
        %1093 = vmatprep.mubr.bf16.mxu0 0
        %1094 = vmatmul.mubr.bf16.gmra.mrb[0].mxu0 %v1056
        %v1095 = vpop.f32.mrb[0].mxu0
        %v1096 = vadd.f32 0.0, %v1095
        %v1097 = vpop.f32.mrb[0].mxu0
        %v1098 = vpop.f32.mrb[0].mxu0
        %v1099 = vpop.f32.mrb[0].mxu0
        %1100 = vdwg.mxu0
        %v1101 = vrcp.pop %v1051
        %v1102 = vmul.f32 %v1096, %v1101
        %v1103 = vadd.f32 %v992, %v1102
        %1104 = vrot.lane.b32.xlu0 %v540, 88
        %v1105 = vpop.permute.xlu0 %1104
        %1106 = vrot.lane.b32.xlu0 %v540, 40
        %v1107 = vpop.permute.xlu0 %1106
        %v1109 = vsel %vm552, %v1105, 0
        %v1112 = vsel %vm552, %v1107, 0
        %1114 = vmatprep.subr.bf16.mxu0 0
        %1115 = vmatpush1.bf16.xpose.msra.mxu0 %v1112
        %1116 = vmatprep.subr.bf16.mxu0 0
        %1117 = vmatpush1.bf16.xpose.msra.mxu0 0
        %1118 = vmatprep.subr.bf16.mxu0 0
        %1119 = vmatpush1.bf16.xpose.msra.mxu0 0
        %1120 = vmatprep.subr.bf16.mxu0 0
        %1121 = vmatpush1.bf16.xpose.msra.mxu0 0
        %1122 = vmatprep.subr.bf16.mxu0 0
        %1123 = vmatpush1.bf16.xpose.msra.mxu0 0
        %1124 = vmatprep.subr.bf16.mxu0 0
        %1125 = vmatpush1.bf16.xpose.msra.mxu0 0
        %1126 = vmatprep.subr.bf16.mxu0 0
        %1127 = vmatpush1.bf16.xpose.msra.mxu0 0
        %1128 = vmatprep.subr.bf16.mxu0 0
        %1129 = vmatpush1.bf16.xpose.msra.mxu0 0
        %1130 = vmatprep.subr.bf16.mxu0 0
        %1131 = vmatpush1.bf16.xpose.msra.mxu0 0
        %1132 = vmatprep.subr.bf16.mxu0 0
        %1133 = vmatpush1.bf16.xpose.msra.mxu0 0
        %1134 = vmatprep.subr.bf16.mxu0 0
        %1135 = vmatpush1.bf16.xpose.msra.mxu0 0
        %1136 = vmatprep.subr.bf16.mxu0 0
        %1137 = vmatpush1.bf16.xpose.msra.mxu0 0
        %1138 = vmatprep.subr.bf16.mxu0 0
        %1139 = vmatpush1.bf16.xpose.msra.mxu0 0
        %1140 = vmatprep.subr.bf16.mxu0 0
        %1141 = vmatpush1.bf16.xpose.msra.mxu0 0
        %1142 = vmatprep.subr.bf16.mxu0 0
        %1143 = vmatpush1.bf16.xpose.msra.mxu0 0
        %1144 = vmatprep.subr.bf16.mxu0 0
        %1145 = vmatpush1.bf16.xpose.msra.mxu0 0
        %1146 = vmatprep.mubr.bf16.mxu0 0
        %1147 = vmatmul.mubr.bf16.gmra.mrb[0].mxu0 %v1109
        %v1148 = vpop.f32.mrb[0].mxu0
        %v1149 = vadd.f32 %v548, %v1148
        %v1150 = vpop.f32.mrb[0].mxu0
        %v1151 = vpop.f32.mrb[0].mxu0
        %v1152 = vpop.f32.mrb[0].mxu0
        %1153 = vdwg.mxu0
        %v1154 = vsel %vm552, %v1149, -inf
        %1155 = vmax.xlane.f32.xlu0 %v1154
        %v1156 = vpop.xlane.xlu0 %1155
        %v1157 = vsub.f32 %v1149, %v1156
        %v1158 = vmul.f32 %v1157, 1.442695
        %v1159 = vpow.pop %v1158
        %v1160 = vsel %vm552, %v1159, 0.0
        %1161 = vadd.xlane.f32.xlu0 %v1160
        %v1162 = vpop.xlane.xlu0 %1161
        %v1163 = vpack.c.bf16 %v1159, %v1159
        %v1165 = vsel %vm552, %v1163, 0
        %v1168 = vsel %vm614, %v542, 0
        %1170 = vmatprep.subr.bf16.mxu0 0
        %1171 = vmatpush1.bf16.msra.mxu0 %v1168
        %1172 = vmatprep.subr.bf16.mxu0 0
        %1173 = vmatpush1.bf16.msra.mxu0 0
        %1174 = vmatprep.subr.bf16.mxu0 0
        %1175 = vmatpush1.bf16.msra.mxu0 0
        %1176 = vmatprep.subr.bf16.mxu0 0
        %1177 = vmatpush1.bf16.msra.mxu0 0
        %1178 = vmatprep.subr.bf16.mxu0 0
        %1179 = vmatpush1.bf16.msra.mxu0 0
        %1180 = vmatprep.subr.bf16.mxu0 0
        %1181 = vmatpush1.bf16.msra.mxu0 0
        %1182 = vmatprep.subr.bf16.mxu0 0
        %1183 = vmatpush1.bf16.msra.mxu0 0
        %1184 = vmatprep.subr.bf16.mxu0 0
        %1185 = vmatpush1.bf16.msra.mxu0 0
        %1186 = vmatprep.subr.bf16.mxu0 0
        %1187 = vmatpush1.bf16.msra.mxu0 0
        %1188 = vmatprep.subr.bf16.mxu0 0
        %1189 = vmatpush1.bf16.msra.mxu0 0
        %1190 = vmatprep.subr.bf16.mxu0 0
        %1191 = vmatpush1.bf16.msra.mxu0 0
        %1192 = vmatprep.subr.bf16.mxu0 0
        %1193 = vmatpush1.bf16.msra.mxu0 0
        %1194 = vmatprep.subr.bf16.mxu0 0
        %1195 = vmatpush1.bf16.msra.mxu0 0
        %1196 = vmatprep.subr.bf16.mxu0 0
        %1197 = vmatpush1.bf16.msra.mxu0 0
        %1198 = vmatprep.subr.bf16.mxu0 0
        %1199 = vmatpush1.bf16.msra.mxu0 0
        %1200 = vmatprep.subr.bf16.mxu0 0
        %1201 = vmatpush1.bf16.msra.mxu0 0
        %1202 = vmatprep.mubr.bf16.mxu0 0
        %1203 = vmatmul.mubr.bf16.gmra.mrb[0].mxu0 %v1165
        %v1204 = vpop.f32.mrb[0].mxu0
        %v1205 = vadd.f32 0.0, %v1204
        %v1206 = vpop.f32.mrb[0].mxu0
        %v1207 = vpop.f32.mrb[0].mxu0
        %v1208 = vpop.f32.mrb[0].mxu0
        %1209 = vdwg.mxu0
        %v1210 = vrcp.pop %v1162
        %v1211 = vmul.f32 %v1205, %v1210
        %v1212 = vadd.f32 %v1103, %v1211
        %v1213 = vadd.f32 %v383, %v1212
        %v1214 = vld [vmem:[%s4] sm:$0x1]
        %v1216 = vlaneseq
        %v1217 = vshrl.u32 %v1216, 7
        %v1218 = vsub.s32 0, %v1217
        %v1219 = vrot.slane %v1214, %v1218
        %v1221 = vadd.f32 %v1213, %v1219
        %v1222 = vld [vmem:[%s5] sm:$0x1]
        %v1223 = vld [vmem:[%s6] sm:$0x1]
        %v1224 = vsel %vm386, %v1221, 0.0
        %1225 = vadd.xlane.f32.xlu0 %v1224
        %v1226 = vpop.xlane.xlu0 %1225
        %v1227 = vmul.f32 %v1226, %v390
        %v1228 = vsub.f32 %v1221, %v1227
        %v1229 = vmul.f32 %v1228, %v1228
        %v1230 = vsel %vm386, %v1229, 0.0
        %1231 = vadd.xlane.f32.xlu0 %v1230
        %v1232 = vpop.xlane.xlu0 %1231
        %v1233 = vmul.f32 %v1232, %v390
        %v1234 = vadd.f32 %v1233, 1e-05
        %v1235 = vrsqrt.pop %v1234
        %v1236 = vmul.f32 %v1228, %v1235
        %v1238 = vlaneseq
        %v1239 = vshrl.u32 %v1238, 7
        %v1240 = vsub.s32 0, %v1239
        %v1241 = vrot.slane %v1222, %v1240
        %v1243 = vmul.f32 %v1236, %v1241
        %v1245 = vlaneseq
        %v1246 = vshrl.u32 %v1245, 7
        %v1247 = vsub.s32 0, %v1246
        %v1248 = vrot.slane %v1223, %v1247
        %v1250 = vadd.f32 %v1243, %v1248
        %v1251 = vpack.c.bf16 %v1250, %v1250
        %v1252 = vld [vmem:[%s7] sm:$0xf]
        %v1253 = vld [vmem:[%s7 + $0x4] sm:$0xf]
        %v1254 = vld [vmem:[%s7 + $0x8] sm:$0xf]
        %v1255 = vld [vmem:[%s7 + $0xc] sm:$0xf]
        %v1256 = vld [vmem:[%s8] sm:$0x1]
        %v1258 = vlaneseq
        %v1259 = vshrl.u32 %v1258, 7
        %v1260 = vsub.s32 0, %v1259
        %v1261 = vrot.slane %v1256, %v1260
        %v1267 = vunpack.c.l.b16 %v1252
        %v1268 = vunpack.c.l.b16 %v1253
        %v1269 = vunpack.c.l.b16 %v1254
        %v1270 = vunpack.c.l.b16 %v1255
        %v1271 = vpack.c.b16 %v1268, %v1267
        %v1272 = vpack.c.b16 %v1270, %v1269
        %v1276 = vsel %vm386, %v1251, 0
        %1278 = vmatprep.subr.bf16.mxu0 0
        %1279 = vmatpush1.bf16.msra.mxu0 %v1271
        %1280 = vmatprep.subr.bf16.mxu0 0
        %1281 = vmatpush1.bf16.msra.mxu0 %v1272
        %1282 = vmatprep.subr.bf16.mxu0 0
        %1283 = vmatpush1.bf16.msra.mxu0 0
        %1284 = vmatprep.subr.bf16.mxu0 0
        %1285 = vmatpush1.bf16.msra.mxu0 0
        %1286 = vmatprep.subr.bf16.mxu0 0
        %1287 = vmatpush1.bf16.msra.mxu0 0
        %1288 = vmatprep.subr.bf16.mxu0 0
        %1289 = vmatpush1.bf16.msra.mxu0 0
        %1290 = vmatprep.subr.bf16.mxu0 0
        %1291 = vmatpush1.bf16.msra.mxu0 0
        %1292 = vmatprep.subr.bf16.mxu0 0
        %1293 = vmatpush1.bf16.msra.mxu0 0
        %1294 = vmatprep.subr.bf16.mxu0 0
        %1295 = vmatpush1.bf16.msra.mxu0 0
        %1296 = vmatprep.subr.bf16.mxu0 0
        %1297 = vmatpush1.bf16.msra.mxu0 0
        %1298 = vmatprep.subr.bf16.mxu0 0
        %1299 = vmatpush1.bf16.msra.mxu0 0
        %1300 = vmatprep.subr.bf16.mxu0 0
        %1301 = vmatpush1.bf16.msra.mxu0 0
        %1302 = vmatprep.subr.bf16.mxu0 0
        %1303 = vmatpush1.bf16.msra.mxu0 0
        %1304 = vmatprep.subr.bf16.mxu0 0
        %1305 = vmatpush1.bf16.msra.mxu0 0
        %1306 = vmatprep.subr.bf16.mxu0 0
        %1307 = vmatpush1.bf16.msra.mxu0 0
        %1308 = vmatprep.subr.bf16.mxu0 0
        %1309 = vmatpush1.bf16.msra.mxu0 0
        %1310 = vmatprep.mubr.bf16.mxu0 0
        %1311 = vmatmul.mubr.bf16.gmra.mrb[0].mxu0 %v1276
        %v1312 = vpop.f32.mrb[0].mxu0
        %v1313 = vadd.f32 %v1261, %v1312
        %v1314 = vpop.f32.mrb[0].mxu0
        %v1315 = vpop.f32.mrb[0].mxu0
        %v1316 = vpop.f32.mrb[0].mxu0
        %1317 = vdwg.mxu0
        %v1318 = vmax.f32 %v1313, 0.0
        %v1319 = vpack.c.bf16 %v1318, %v1318
        %v1320 = vld [vmem:[%s9] sm:$0xf]
        %v1321 = vld [vmem:[%s9 + $0x4] sm:$0xf]
        %v1322 = vld [vmem:[%s9 + $0x8] sm:$0xf]
        %v1323 = vld [vmem:[%s9 + $0xc] sm:$0xf]
        %v1324 = vld [vmem:[%s9 + $0x10] sm:$0xf]
        %v1325 = vld [vmem:[%s9 + $0x14] sm:$0xf]
        %v1326 = vld [vmem:[%s9 + $0x18] sm:$0xf]
        %v1327 = vld [vmem:[%s9 + $0x1c] sm:$0xf]
        %v1328 = vld [vmem:[%s9 + $0x20] sm:$0xf]
        %v1329 = vld [vmem:[%s9 + $0x24] sm:$0xf]
        %v1330 = vld [vmem:[%s9 + $0x28] sm:$0xf]
        %v1331 = vld [vmem:[%s9 + $0x2c] sm:$0xf]
        %v1332 = vld [vmem:[%s9 + $0x30] sm:$0xf]
        %v1333 = vld [vmem:[%s9 + $0x34] sm:$0xf]
        %v1334 = vld [vmem:[%s9 + $0x38] sm:$0xf]
        %v1335 = vld [vmem:[%s9 + $0x3c] sm:$0xf]
        %v1336 = vld [vmem:[%s10] sm:$0x1]
        %v1338 = vlaneseq
        %v1339 = vshrl.u32 %v1338, 7
        %v1340 = vsub.s32 0, %v1339
        %v1341 = vrot.slane %v1336, %v1340
        %v1359 = vunpack.c.l.b16 %v1320
        %v1360 = vunpack.c.l.b16 %v1321
        %v1361 = vunpack.c.l.b16 %v1322
        %v1362 = vunpack.c.l.b16 %v1323
        %v1363 = vunpack.c.l.b16 %v1324
        %v1364 = vunpack.c.l.b16 %v1325
        %v1365 = vunpack.c.l.b16 %v1326
        %v1366 = vunpack.c.l.b16 %v1327
        %v1367 = vunpack.c.l.b16 %v1328
        %v1368 = vunpack.c.l.b16 %v1329
        %v1369 = vunpack.c.l.b16 %v1330
        %v1370 = vunpack.c.l.b16 %v1331
        %v1371 = vunpack.c.l.b16 %v1332
        %v1372 = vunpack.c.l.b16 %v1333
        %v1373 = vunpack.c.l.b16 %v1334
        %v1374 = vunpack.c.l.b16 %v1335
        %v1375 = vpack.c.b16 %v1360, %v1359
        %v1376 = vpack.c.b16 %v1362, %v1361
        %v1377 = vpack.c.b16 %v1364, %v1363
        %v1378 = vpack.c.b16 %v1366, %v1365
        %v1379 = vpack.c.b16 %v1368, %v1367
        %v1380 = vpack.c.b16 %v1370, %v1369
        %v1381 = vpack.c.b16 %v1372, %v1371
        %v1382 = vpack.c.b16 %v1374, %v1373
        %1391 = vmatprep.subr.bf16.mxu0 0
        %1392 = vmatpush1.bf16.msra.mxu0 %v1375
        %1393 = vmatprep.subr.bf16.mxu0 0
        %1394 = vmatpush1.bf16.msra.mxu0 %v1376
        %1395 = vmatprep.subr.bf16.mxu0 0
        %1396 = vmatpush1.bf16.msra.mxu0 %v1377
        %1397 = vmatprep.subr.bf16.mxu0 0
        %1398 = vmatpush1.bf16.msra.mxu0 %v1378
        %1399 = vmatprep.subr.bf16.mxu0 0
        %1400 = vmatpush1.bf16.msra.mxu0 %v1379
        %1401 = vmatprep.subr.bf16.mxu0 0
        %1402 = vmatpush1.bf16.msra.mxu0 %v1380
        %1403 = vmatprep.subr.bf16.mxu0 0
        %1404 = vmatpush1.bf16.msra.mxu0 %v1381
        %1405 = vmatprep.subr.bf16.mxu0 0
        %1406 = vmatpush1.bf16.msra.mxu0 %v1382
        %1407 = vmatprep.subr.bf16.mxu0 0
        %1408 = vmatpush1.bf16.msra.mxu0 0
        %1409 = vmatprep.subr.bf16.mxu0 0
        %1410 = vmatpush1.bf16.msra.mxu0 0
        %1411 = vmatprep.subr.bf16.mxu0 0
        %1412 = vmatpush1.bf16.msra.mxu0 0
        %1413 = vmatprep.subr.bf16.mxu0 0
        %1414 = vmatpush1.bf16.msra.mxu0 0
        %1415 = vmatprep.subr.bf16.mxu0 0
        %1416 = vmatpush1.bf16.msra.mxu0 0
        %1417 = vmatprep.subr.bf16.mxu0 0
        %1418 = vmatpush1.bf16.msra.mxu0 0
        %1419 = vmatprep.subr.bf16.mxu0 0
        %1420 = vmatpush1.bf16.msra.mxu0 0
        %1421 = vmatprep.subr.bf16.mxu0 0
        %1422 = vmatpush1.bf16.msra.mxu0 0
        %1423 = vmatprep.mubr.bf16.mxu0 0
        %1424 = vmatmul.mubr.bf16.gmra.mrb[0].mxu0 %v1319
        %v1425 = vpop.f32.mrb[0].mxu0
        %v1426 = vadd.f32 %v1341, %v1425
        %v1427 = vpop.f32.mrb[0].mxu0
        %v1428 = vpop.f32.mrb[0].mxu0
        %v1429 = vpop.f32.mrb[0].mxu0
        %1430 = vdwg.mxu0
        %v1431 = vadd.f32 %v1221, %v1426
        %1432 = vst.msk [vmem:[%s377] sm:$0xff] %vm386, %v1431
        %s1433 = sand.u32 %s269, 1
        %s1434 = scalar_lea.sflag [#allocation3], %s1433
        %s1435 = sand.u32 %s269, 1
        %s1436 = smul.addr %s1435, 8
        %s1437 = scalar_lea.vmem [#allocation2], %s1436
        // Predicated region
        $region65: #{tpu_custom_call.1} parent=63 // pred_check
          %p1438 = pneg %p279
        $region66: #{tpu_custom_call.1} parent=63 // pred_check_branch
          %1440 = sbr.rel (%p1438) target = $region68
        $region67: #{tpu_custom_call.1} parent=63 // pred_region
          %s1442 = ssub.s32 128, 128
          %1443 = vsyncadd %s1434, %s1442
          %s1444 = smul.addr %s25, 128
          %s1445 = scalar_lea.hbm %s11, %s1444
          %s1447 = sshll.u32 %s1437, 4
          %s1448 = int_to_ptr.vmem [resolvable:$true] %s1447
          %1450 = dma.vmem_to_hbm [thread:$0]  %s1448, 128, %s1445, %s1434
        $region68: #{tpu_custom_call.1} parent=63 // pred_fallthru
          _
      $region64: #{tpu_custom_call.1} parent=5 // pred_fallthru
        _
      %p1451 = scmp.le.s32.totalorder 2, %s20
      // Predicated region
      $region69: #{tpu_custom_call.1} parent=5 // pred_check
        %p1452 = pneg %p1451
      $region70: #{tpu_custom_call.1} parent=5 // pred_check_branch
        %1454 = sbr.rel (%p1452) target = $region72
      $region71: #{tpu_custom_call.1} parent=5 // pred_region
        %s1455 = ssub.s32 %s20, 2
        // Predicated region
        $region73: #{tpu_custom_call.1} parent=71 // pred_check
          %p1456 = pneg %p285
        $region74: #{tpu_custom_call.1} parent=71 // pred_check_branch
          %1458 = sbr.rel (%p1456) target = $region76
        $region75: #{tpu_custom_call.1} parent=71 // pred_region
          %s1459 = sand.u32 %s270, 1
          %s1460 = scalar_lea.sflag [#allocation3], %s1459
          %s1461 = sand.u32 %s270, 1
          %s1462 = smul.addr %s1461, 8
          %s1463 = scalar_lea.vmem [#allocation2], %s1462
          %1464 = dma.done %s1460, 128
        $region76: #{tpu_custom_call.1} parent=71 // pred_fallthru
          _
      $region72: #{tpu_custom_call.1} parent=5 // pred_fallthru
        _
    $region6: #{tpu_custom_call.1} parent=1 // loop_footer
      %s24 = sadd.s32 1, %s20
    $region7: #{tpu_custom_call.1} parent=1 // loop_footer_branch
      %19 = sbr.rel target = $region3
    $region8: #{tpu_custom_call.1} parent=1 // loop_exit
      _
    %1465 = vsyncpa [#allocation3], 1
    %s1466 = scalar_lea.sflag [#allocation3], 1
    %1467 = vsyncpa %s1466, 1

</llo_original>
